<compile_context>
chip_gen: v7x
topology: tpu7x:2x2x1
jax: 0.10.0
libtpu: 0.0.40
codegen_flags: <defaults>
</compile_context>

<pallas_src>
import jax
import jax.numpy as jnp
from jax import lax
from jax.experimental import pallas as pl
from jax.experimental.pallas import tpu as pltpu


# ----------------------------------------------------------------------------- resize glue
def _resize_indices(in_size, out_size):
    # matches PyTorch F.interpolate(mode='bilinear', align_corners=False)
    scale = in_size / out_size
    dst = jnp.arange(out_size, dtype=jnp.float32)
    src = jnp.maximum(scale * (dst + 0.5) - 0.5, 0.0)
    i0 = jnp.clip(jnp.floor(src).astype(jnp.int32), 0, in_size - 1)
    i1 = jnp.minimum(i0 + 1, in_size - 1)
    w1 = src - i0.astype(jnp.float32)
    return i0, i1, 1.0 - w1, w1


def bilinear_resize_nchw(x, out_h, out_w):
    n, c, h, w = x.shape
    if (h, w) == (out_h, out_w):
        return x
    i0, i1, wy0, wy1 = _resize_indices(h, out_h)
    j0, j1, wx0, wx1 = _resize_indices(w, out_w)
    xr = (x[:, :, i0, :] * wy0[None, None, :, None]
          + x[:, :, i1, :] * wy1[None, None, :, None])
    xc = (xr[:, :, :, j0] * wx0[None, None, None, :]
          + xr[:, :, :, j1] * wx1[None, None, None, :])
    return xc


# ----------------------------------------------------------------------------- kernel
def _make_kernel(H, W, HW, K, C, deep_fuse):
    L = K * HW
    pow2_hw = (HW & (HW - 1)) == 0
    pow2_w = (W & (W - 1)) == 0

    def sigmoid(z):
        # exp + approximate reciprocal: both land on the EUP slot.
        # (v6e/v7x could run this in bf16 for 2x EUP throughput; kept f32 for v5e safety.)
        return pl.reciprocal(1.0 + jnp.exp(-z), approx=True)

    def kernel(*args):
        x_refs = args[:K]
        (w1_ref, b1_ref, w2_ref, b2_ref, w3_ref, b3_ref,
         wf_ref, bfu_ref, out_ref) = args[K:]

        # All K (resized) scales concatenated along lanes: (C, K*HW), register-level only.
        xall_bf = jnp.concatenate([x_refs[k][0] for k in range(K)], axis=1)
        xall = xall_bf.astype(jnp.float32)

        # ---- 4 base boundary masks (top/bottom rows, left/right cols), built in-kernel.
        # They also zero every tap that would cross a scale boundary on the concatenated
        # lane axis (each scale occupies a contiguous HW block and its edges coincide
        # with the top/bottom/left/right masks).
        pos = lax.broadcasted_iota(jnp.int32, (1, L), 1)
        pin = jnp.bitwise_and(pos, HW - 1) if pow2_hw else pos % HW   # pos inside a scale
        pw = jnp.bitwise_and(pin, W - 1) if pow2_w else pin % W       # col inside a row
        not_top = pin >= W
        not_bot = pin < (H - 1) * W
        not_left = pw >= 1
        not_right = pw <= W - 2

        # ---- channel attention (shared weights -> one matmul streaming K*HW columns) ----
        h1 = jnp.maximum(
            jnp.dot(w1_ref[...], xall_bf, preferred_element_type=jnp.float32)
            + b1_ref[...], 0.0)                                        # (Crp, L)
        cw = sigmoid(
            jnp.dot(w2_ref[...], h1.astype(jnp.bfloat16),
                    preferred_element_type=jnp.float32) + b2_ref[...])  # (C, L)
        xc = xall * cw                                                 # (C, L) f32
        xc_bf = xc.astype(jnp.bfloat16)

        # ---- spatial attention: per-tap channel contraction, then masked lane rolls ----
        taps = jnp.dot(w3_ref[...], xc_bf, preferred_element_type=jnp.float32)  # (16, L)
        s = taps[4:5, :] + b3_ref[0]                                   # centre tap: no roll/mask
        for tap in range(9):
            if tap == 4:
                continue
            oy, ox = tap // 3 - 1, tap % 3 - 1
            d = oy * W + ox
            row = pltpu.roll(taps[tap:tap + 1, :], (-d) % L, 1)        # row[p] <- taps[tap, p+d]
            m = None
            for cond in ((not_top if oy == -1 else None),
                         (not_bot if oy == 1 else None),
                         (not_left if ox == -1 else None),
                         (not_right if ox == 1 else None)):
                if cond is not None:
                    m = cond if m is None else jnp.logical_and(m, cond)
            s = s + jnp.where(m, row, 0.0)                             # true zero pad
        sw = sigmoid(s)                                                # (1, L)
        g_bf = (xc * sw).astype(jnp.bfloat16)                          # (C, L)

        # ---- linear_fuse ----
        wf = wf_ref[...]                                               # (C, K*C)
        if deep_fuse:
            # tiny C: build (K*C, HW) in registers and use one deep contraction.
            gcat = jnp.concatenate(
                [g_bf[:, k * HW:(k + 1) * HW] for k in range(K)], axis=0)
            acc = jnp.dot(wf, gcat, preferred_element_type=jnp.float32)
        else:
            # production C: per-scale accumulation keeps live VMEM small; same math.
            acc = jnp.zeros((C, HW), jnp.float32)
            for k in range(K):
                acc = acc + jnp.dot(wf[:, k * C:(k + 1) * C],
                                    g_bf[:, k * HW:(k + 1) * HW],
                                    preferred_element_type=jnp.float32)
        out_ref[0] = (acc + bfu_ref[...]).astype(out_ref.dtype)

    return kernel


def dqcm_pallas(x_all, p, out_dtype=jnp.bfloat16):
    """x_all: list of NCHW float32 arrays (PyTorch convention). Returns NCHW."""
    N, C, H, W = x_all[0].shape
    K = len(x_all)
    HW = H * W
    Cr = p['ca_w1'].shape[1]
    Crp = max(((Cr + 7) // 8) * 8, 8)    # pad reduced channels to a sublane multiple
    TAPP = 16                            # pad 9 taps to 16 rows (zero weights)

    # Scales 1..K-1 are resized to the base resolution by XLA (scale 0 passes through
    # untouched); each scale is a separate bf16 kernel operand in flattened-NCHW layout
    # (C on sublanes, HW on lanes).  No concatenated xcat is ever materialized in HBM.
    xs = [bilinear_resize_nchw(x, H, W).reshape(N, C, HW).astype(jnp.bfloat16)
          for x in x_all]

    # Weights in transposed layout (out-channels on sublanes), bf16 for the MXU.
    w1t = jnp.zeros((Crp, C), jnp.float32).at[:Cr, :].set(p['ca_w1'].T).astype(jnp.bfloat16)
    b1 = jnp.zeros((Crp, 1), jnp.float32).at[:Cr, 0].set(p['ca_b1'])
    w2t = jnp.zeros((C, Crp), jnp.float32).at[:, :Cr].set(p['ca_w2'].T).astype(jnp.bfloat16)
    b2 = p['ca_b2'].reshape(C, 1).astype(jnp.float32)
    w3t = jnp.zeros((TAPP, C), jnp.float32).at[:9, :].set(p['sa_w_k'].T).astype(jnp.bfloat16)
    b3 = p['sa_b'].reshape(1).astype(jnp.float32)                      # SMEM scalar
    wft = p['fuse_w'].reshape(K * C, C).T.astype(jnp.bfloat16)         # (C, K*C)
    bfu = p['fuse_b'].reshape(C, 1).astype(jnp.float32)

    deep_fuse = C < 128
    kernel = _make_kernel(H, W, HW, K, C, deep_fuse)

    L = K * HW
    out_bytes = jnp.dtype(out_dtype).itemsize
    flops = int(N * L * (2 * Crp * C + 2 * C * Crp + 2 * TAPP * C + 2 * C * C + 10 * C))
    bytes_acc = int(K * N * C * HW * 2 + N * C * HW * out_bytes
                    + (w1t.size + w2t.size + w3t.size + wft.size) * 2
                    + (b1.size + b2.size + b3.size + bfu.size) * 4)

    # Rough per-step VMEM need (double-buffered bf16 inputs, output tile, f32 temps).
    vmem_est = 2 * 2 * (K * C * HW * 2) + 2 * C * HW * out_bytes + 8 * C * L * 4
    vmem_limit = int(min(48 * 1024 * 1024, max(32 * 1024 * 1024, 2 * vmem_est)))

    x_spec = pl.BlockSpec((1, C, HW), lambda n: (n, 0, 0))
    const2d = lambda n: (0, 0)

    out_flat = pl.pallas_call(
        kernel,
        out_shape=jax.ShapeDtypeStruct((N, C, HW), out_dtype),
        grid_spec=pltpu.PrefetchScalarGridSpec(
            num_scalar_prefetch=0,
            grid=(N,),                                    # K and scales handled in-kernel
            in_specs=[x_spec] * K + [
                pl.BlockSpec((Crp, C), const2d),          # ca_w1^T (padded)
                pl.BlockSpec((Crp, 1), const2d),          # ca_b1
                pl.BlockSpec((C, Crp), const2d),          # ca_w2^T (padded)
                pl.BlockSpec((C, 1), const2d),            # ca_b2
                pl.BlockSpec((TAPP, C), const2d),         # sa_w taps (padded)
                pl.BlockSpec(memory_space=pltpu.MemorySpace.SMEM),   # sa_b (scalar)
                pl.BlockSpec((C, K * C), const2d),        # fuse_w^T
                pl.BlockSpec((C, 1), const2d),            # fuse_b
            ],
            out_specs=pl.BlockSpec((1, C, HW), lambda n: (n, 0, 0)),
        ),
        compiler_params=pltpu.CompilerParams(
            dimension_semantics=("parallel",),
            vmem_limit_bytes=vmem_limit),
        cost_estimate=pl.CostEstimate(
            flops=flops,
            transcendentals=int(N * L * (C + 1)),
            bytes_accessed=bytes_acc),
    )(*xs, w1t, b1, w2t, b2, w3t, b3, wft, bfu)

    return out_flat.reshape(N, C, H, W)


# ----------------------------------------------------------------------------- reference
def dqcm_reference(x_all, p):
    N, C, H, W = x_all[0].shape
    gated = []
    for x in x_all:
        xr = bilinear_resize_nchw(x, H, W)
        xh = jnp.transpose(xr, (0, 2, 3, 1))                           # NHWC
        cw = jax.nn.sigmoid(
            jnp.maximum(xh @ p['ca_w1'] + p['ca_b1'], 0.0) @ p['ca_w2'] + p['ca_b2'])
        xh = xh * cw
        s = lax.conv_general_dilated(
            xh, p['sa_w_hwio'], (1, 1), 'SAME',
            dimension_numbers=('NHWC', 'HWIO', 'NHWC')) + p['sa_b']
        gated.append(xh * jax.nn.sigmoid(s))
    out = sum(g @ p['fuse_w'][k] for k, g in enumerate(gated)) + p['fuse_b']
    return jnp.transpose(out, (0, 3, 1, 2))


# ----------------------------------------------------------------------------- params
def make_params(key, C, K, reduction=16):
    Cr = max(C // reduction, 1)
    ks = jax.random.split(key, 8)
    sa_w = jax.random.normal(ks[4], (C, 3, 3), jnp.float32) * 0.2      # out_ch = 1
    p = {
        'ca_w1': jax.random.normal(ks[0], (C, Cr), jnp.float32) * 0.3,
        'ca_b1': jax.random.normal(ks[1], (Cr,), jnp.float32) * 0.1,
        'ca_w2': jax.random.normal(ks[2], (Cr, C), jnp.float32) * 0.3,
        'ca_b2': jax.random.normal(ks[3], (C,), jnp.float32) * 0.1,
        'sa_w_k': sa_w.reshape(C, 9),                                  # kernel layout
        'sa_w_hwio': jnp.transpose(sa_w, (1, 2, 0))[:, :, :, None],    # reference layout
        'sa_b': jax.random.normal(ks[5], (), jnp.float32) * 0.1,
        'fuse_w': jax.random.normal(ks[6], (K, C, C), jnp.float32) / jnp.sqrt(float(C * K)),
        'fuse_b': jax.random.normal(ks[7], (C,), jnp.float32) * 0.1,
    }
    return p


if __name__ == "__main__":
    key = jax.random.PRNGKey(0)
    N, C, K = 2, 32, 4                       # embedding_dim=32, index=4 (small shapes)
    sizes = [(16, 16), (8, 8), (4, 4), (2, 2)]
    kx, kp = jax.random.split(key)
    xkeys = jax.random.split(kx, K)
    x_all = [jax.random.normal(xkeys[i], (N, C, h, w), jnp.float32)
             for i, (h, w) in enumerate(sizes)]
    params = make_params(kp, C, K)

    out = jax.block_until_ready(dqcm_pallas(x_all, params))
    ref = jax.block_until_ready(dqcm_reference(x_all, params))

    assert out.shape == (N, C, 16, 16), out.shape
    err = float(jnp.max(jnp.abs(out.astype(jnp.float32) - ref)))
    assert err < 5e-2, f"max abs err vs reference (bf16 path): {err}"
    print("KERNEL_OK")
</pallas_src>

<mosaic_0001>
module attributes {stable_mosaic.version = 11 : i64} {
  func.func @kernel(%arg0: i32, %arg1: memref<1x32x256xbf16, #tpu.memory_space<vmem>>, %arg2: memref<1x32x256xbf16, #tpu.memory_space<vmem>>, %arg3: memref<1x32x256xbf16, #tpu.memory_space<vmem>>, %arg4: memref<1x32x256xbf16, #tpu.memory_space<vmem>>, %arg5: memref<8x32xbf16, #tpu.memory_space<vmem>>, %arg6: memref<8x1xf32, #tpu.memory_space<vmem>>, %arg7: memref<32x8xbf16, #tpu.memory_space<vmem>>, %arg8: memref<32x1xf32, #tpu.memory_space<vmem>>, %arg9: memref<16x32xbf16, #tpu.memory_space<vmem>>, %arg10: memref<1xf32, #tpu.memory_space<smem>>, %arg11: memref<32x128xbf16, #tpu.memory_space<vmem>>, %arg12: memref<32x1xf32, #tpu.memory_space<vmem>>, %arg13: memref<1x32x256xbf16, #tpu.memory_space<vmem>>) attributes {dimension_semantics = [#tpu.dimension_semantics<parallel>], iteration_bounds = array<i64: 2>, scalar_prefetch = 0 : i64, scratch_operands = 0 : i64, tpu.core_type = #tpu.core_type<tc>, window_params = [{transform_indices = @transform_0, window_bounds = array<i64: 1, 32, 256>}, {transform_indices = @transform_1, window_bounds = array<i64: 1, 32, 256>}, {transform_indices = @transform_2, window_bounds = array<i64: 1, 32, 256>}, {transform_indices = @transform_3, window_bounds = array<i64: 1, 32, 256>}, {pipeline_mode = #tpu.pipeline_mode<synchronous>, transform_indices = @transform_4, window_bounds = array<i64: 8, 32>}, {pipeline_mode = #tpu.pipeline_mode<synchronous>, transform_indices = @transform_5, window_bounds = array<i64: 8, 1>}, {pipeline_mode = #tpu.pipeline_mode<synchronous>, transform_indices = @transform_6, window_bounds = array<i64: 32, 8>}, {pipeline_mode = #tpu.pipeline_mode<synchronous>, transform_indices = @transform_7, window_bounds = array<i64: 32, 1>}, {pipeline_mode = #tpu.pipeline_mode<synchronous>, transform_indices = @transform_8, window_bounds = array<i64: 16, 32>}, {transform_indices = @transform_9, window_bounds = array<i64: 1>}, {pipeline_mode = #tpu.pipeline_mode<synchronous>, transform_indices = @transform_10, window_bounds = array<i64: 32, 128>}, {pipeline_mode = #tpu.pipeline_mode<synchronous>, transform_indices = @transform_11, window_bounds = array<i64: 32, 1>}, {transform_indices = @transform_12, window_bounds = array<i64: 1, 32, 256>}]} {
    %c0 = arith.constant 0 : index
    %c0_0 = arith.constant 0 : index
    %c0_1 = arith.constant 0 : index
    %0 = vector.load %arg1[%c0, %c0_0, %c0_1] : memref<1x32x256xbf16, #tpu.memory_space<vmem>>, vector<1x32x256xbf16>
    %1 = vector.shape_cast %0 : vector<1x32x256xbf16> to vector<32x256xbf16>
    %c0_2 = arith.constant 0 : index
    %c0_3 = arith.constant 0 : index
    %c0_4 = arith.constant 0 : index
    %2 = vector.load %arg2[%c0_2, %c0_3, %c0_4] : memref<1x32x256xbf16, #tpu.memory_space<vmem>>, vector<1x32x256xbf16>
    %3 = vector.shape_cast %2 : vector<1x32x256xbf16> to vector<32x256xbf16>
    %c0_5 = arith.constant 0 : index
    %c0_6 = arith.constant 0 : index
    %c0_7 = arith.constant 0 : index
    %4 = vector.load %arg3[%c0_5, %c0_6, %c0_7] : memref<1x32x256xbf16, #tpu.memory_space<vmem>>, vector<1x32x256xbf16>
    %5 = vector.shape_cast %4 : vector<1x32x256xbf16> to vector<32x256xbf16>
    %c0_8 = arith.constant 0 : index
    %c0_9 = arith.constant 0 : index
    %c0_10 = arith.constant 0 : index
    %6 = vector.load %arg4[%c0_8, %c0_9, %c0_10] : memref<1x32x256xbf16, #tpu.memory_space<vmem>>, vector<1x32x256xbf16>
    %7 = vector.shape_cast %6 : vector<1x32x256xbf16> to vector<32x256xbf16>
    %8 = tpu.concatenate %1, %3, %5, %7 in 1 : vector<32x256xbf16>, vector<32x256xbf16>, vector<32x256xbf16>, vector<32x256xbf16> -> vector<32x1024xbf16>
    %9 = arith.extf %8 : vector<32x1024xbf16> to vector<32x1024xf32>
    %10 = tpu.iota {dimensions = array<i32: 1>} : vector<1x1024xi32>
    %c255_i32 = arith.constant 255 : i32
    %11 = vector.broadcast %c255_i32 : i32 to vector<1x1024xi32>
    %12 = arith.andi %10, %11 : vector<1x1024xi32>
    %c15_i32 = arith.constant 15 : i32
    %13 = vector.broadcast %c15_i32 : i32 to vector<1x1024xi32>
    %14 = arith.andi %12, %13 : vector<1x1024xi32>
    %c16_i32 = arith.constant 16 : i32
    %15 = vector.broadcast %c16_i32 : i32 to vector<1x1024xi32>
    %16 = arith.cmpi sge, %12, %15 : vector<1x1024xi32>
    %c240_i32 = arith.constant 240 : i32
    %17 = vector.broadcast %c240_i32 : i32 to vector<1x1024xi32>
    %18 = arith.cmpi slt, %12, %17 : vector<1x1024xi32>
    %c1_i32 = arith.constant 1 : i32
    %19 = vector.broadcast %c1_i32 : i32 to vector<1x1024xi32>
    %20 = arith.cmpi sge, %14, %19 : vector<1x1024xi32>
    %c14_i32 = arith.constant 14 : i32
    %21 = vector.broadcast %c14_i32 : i32 to vector<1x1024xi32>
    %22 = arith.cmpi sle, %14, %21 : vector<1x1024xi32>
    %c0_11 = arith.constant 0 : index
    %c0_12 = arith.constant 0 : index
    %23 = vector.load %arg5[%c0_11, %c0_12] : memref<8x32xbf16, #tpu.memory_space<vmem>>, vector<8x32xbf16>
    %cst = arith.constant dense<0.000000e+00> : vector<8x1024xf32>
    %24 = tpu.matmul %23, %8, %cst {dimension_numbers = #tpu.dot_dimension_numbers<[1], [0], [0], [1], [0, 0, 1, 1], [], []>} : vector<8x32xbf16>, vector<32x1024xbf16>, vector<8x1024xf32> -> vector<8x1024xf32>
    %c0_13 = arith.constant 0 : index
    %c0_14 = arith.constant 0 : index
    %25 = vector.load %arg6[%c0_13, %c0_14] : memref<8x1xf32, #tpu.memory_space<vmem>>, vector<8x1xf32>
    %26 = vector.broadcast %25 : vector<8x1xf32> to vector<8x1024xf32>
    %27 = arith.addf %24, %26 : vector<8x1024xf32>
    %cst_15 = arith.constant 0.000000e+00 : f32
    %28 = vector.broadcast %cst_15 : f32 to vector<8x1024xf32>
    %29 = arith.maximumf %27, %28 : vector<8x1024xf32>
    %c0_16 = arith.constant 0 : index
    %c0_17 = arith.constant 0 : index
    %30 = vector.load %arg7[%c0_16, %c0_17] : memref<32x8xbf16, #tpu.memory_space<vmem>>, vector<32x8xbf16>
    %31 = arith.truncf %29 : vector<8x1024xf32> to vector<8x1024xbf16>
    %cst_18 = arith.constant dense<0.000000e+00> : vector<32x1024xf32>
    %32 = tpu.matmul %30, %31, %cst_18 {dimension_numbers = #tpu.dot_dimension_numbers<[1], [0], [0], [1], [0, 0, 1, 1], [], []>} : vector<32x8xbf16>, vector<8x1024xbf16>, vector<32x1024xf32> -> vector<32x1024xf32>
    %c0_19 = arith.constant 0 : index
    %c0_20 = arith.constant 0 : index
    %33 = vector.load %arg8[%c0_19, %c0_20] : memref<32x1xf32, #tpu.memory_space<vmem>>, vector<32x1xf32>
    %34 = vector.broadcast %33 : vector<32x1xf32> to vector<32x1024xf32>
    %35 = arith.addf %32, %34 : vector<32x1024xf32>
    %cst_21 = arith.constant 0.000000e+00 : f32
    %36 = vector.broadcast %cst_21 : f32 to vector<32x1024xf32>
    %37 = arith.subf %36, %35 : vector<32x1024xf32>
    %38 = math.exp %37 : vector<32x1024xf32>
    %cst_22 = arith.constant 1.000000e+00 : f32
    %39 = vector.broadcast %cst_22 : f32 to vector<32x1024xf32>
    %40 = arith.addf %39, %38 : vector<32x1024xf32>
    %41 = tpu.reciprocal %40 {approx = true} : vector<32x1024xf32> -> vector<32x1024xf32>
    %42 = arith.mulf %9, %41 : vector<32x1024xf32>
    %43 = arith.truncf %42 : vector<32x1024xf32> to vector<32x1024xbf16>
    %c0_23 = arith.constant 0 : index
    %c0_24 = arith.constant 0 : index
    %44 = vector.load %arg9[%c0_23, %c0_24] : memref<16x32xbf16, #tpu.memory_space<vmem>>, vector<16x32xbf16>
    %cst_25 = arith.constant dense<0.000000e+00> : vector<16x1024xf32>
    %45 = tpu.matmul %44, %43, %cst_25 {dimension_numbers = #tpu.dot_dimension_numbers<[1], [0], [0], [1], [0, 0, 1, 1], [], []>} : vector<16x32xbf16>, vector<32x1024xbf16>, vector<16x1024xf32> -> vector<16x1024xf32>
    %46 = vector.extract_strided_slice %45 {offsets = [4, 0], sizes = [1, 1024], strides = [1, 1]} : vector<16x1024xf32> to vector<1x1024xf32>
    %c0_26 = arith.constant 0 : index
    %47 = memref.load %arg10[%c0_26] : memref<1xf32, #tpu.memory_space<smem>>
    %48 = vector.broadcast %47 : f32 to vector<1x1024xf32>
    %49 = arith.addf %46, %48 : vector<1x1024xf32>
    %50 = vector.extract_strided_slice %45 {offsets = [0, 0], sizes = [1, 1024], strides = [1, 1]} : vector<16x1024xf32> to vector<1x1024xf32>
    %c17_i32 = arith.constant 17 : i32
    %51 = tpu.dynamic_rotate %50 by %c17_i32 dim 1 : vector<1x1024xf32>, i32 -> vector<1x1024xf32>
    %52 = arith.andi %16, %20 : vector<1x1024xi1>
    %cst_27 = arith.constant 0.000000e+00 : f32
    %53 = vector.broadcast %cst_27 : f32 to vector<1x1024xf32>
    %54 = arith.select %52, %51, %53 : vector<1x1024xi1>, vector<1x1024xf32>
    %55 = arith.addf %49, %54 : vector<1x1024xf32>
    %56 = vector.extract_strided_slice %45 {offsets = [1, 0], sizes = [1, 1024], strides = [1, 1]} : vector<16x1024xf32> to vector<1x1024xf32>
    %c16_i32_28 = arith.constant 16 : i32
    %57 = tpu.dynamic_rotate %56 by %c16_i32_28 dim 1 : vector<1x1024xf32>, i32 -> vector<1x1024xf32>
    %cst_29 = arith.constant 0.000000e+00 : f32
    %58 = vector.broadcast %cst_29 : f32 to vector<1x1024xf32>
    %59 = arith.select %16, %57, %58 : vector<1x1024xi1>, vector<1x1024xf32>
    %60 = arith.addf %55, %59 : vector<1x1024xf32>
    %61 = vector.extract_strided_slice %45 {offsets = [2, 0], sizes = [1, 1024], strides = [1, 1]} : vector<16x1024xf32> to vector<1x1024xf32>
    %c15_i32_30 = arith.constant 15 : i32
    %62 = tpu.dynamic_rotate %61 by %c15_i32_30 dim 1 : vector<1x1024xf32>, i32 -> vector<1x1024xf32>
    %63 = arith.andi %16, %22 : vector<1x1024xi1>
    %cst_31 = arith.constant 0.000000e+00 : f32
    %64 = vector.broadcast %cst_31 : f32 to vector<1x1024xf32>
    %65 = arith.select %63, %62, %64 : vector<1x1024xi1>, vector<1x1024xf32>
    %66 = arith.addf %60, %65 : vector<1x1024xf32>
    %67 = vector.extract_strided_slice %45 {offsets = [3, 0], sizes = [1, 1024], strides = [1, 1]} : vector<16x1024xf32> to vector<1x1024xf32>
    %c1_i32_32 = arith.constant 1 : i32
    %68 = tpu.dynamic_rotate %67 by %c1_i32_32 dim 1 : vector<1x1024xf32>, i32 -> vector<1x1024xf32>
    %cst_33 = arith.constant 0.000000e+00 : f32
    %69 = vector.broadcast %cst_33 : f32 to vector<1x1024xf32>
    %70 = arith.select %20, %68, %69 : vector<1x1024xi1>, vector<1x1024xf32>
    %71 = arith.addf %66, %70 : vector<1x1024xf32>
    %72 = vector.extract_strided_slice %45 {offsets = [5, 0], sizes = [1, 1024], strides = [1, 1]} : vector<16x1024xf32> to vector<1x1024xf32>
    %c1023_i32 = arith.constant 1023 : i32
    %73 = tpu.dynamic_rotate %72 by %c1023_i32 dim 1 : vector<1x1024xf32>, i32 -> vector<1x1024xf32>
    %cst_34 = arith.constant 0.000000e+00 : f32
    %74 = vector.broadcast %cst_34 : f32 to vector<1x1024xf32>
    %75 = arith.select %22, %73, %74 : vector<1x1024xi1>, vector<1x1024xf32>
    %76 = arith.addf %71, %75 : vector<1x1024xf32>
    %77 = vector.extract_strided_slice %45 {offsets = [6, 0], sizes = [1, 1024], strides = [1, 1]} : vector<16x1024xf32> to vector<1x1024xf32>
    %c1009_i32 = arith.constant 1009 : i32
    %78 = tpu.dynamic_rotate %77 by %c1009_i32 dim 1 : vector<1x1024xf32>, i32 -> vector<1x1024xf32>
    %79 = arith.andi %18, %20 : vector<1x1024xi1>
    %cst_35 = arith.constant 0.000000e+00 : f32
    %80 = vector.broadcast %cst_35 : f32 to vector<1x1024xf32>
    %81 = arith.select %79, %78, %80 : vector<1x1024xi1>, vector<1x1024xf32>
    %82 = arith.addf %76, %81 : vector<1x1024xf32>
    %83 = vector.extract_strided_slice %45 {offsets = [7, 0], sizes = [1, 1024], strides = [1, 1]} : vector<16x1024xf32> to vector<1x1024xf32>
    %c1008_i32 = arith.constant 1008 : i32
    %84 = tpu.dynamic_rotate %83 by %c1008_i32 dim 1 : vector<1x1024xf32>, i32 -> vector<1x1024xf32>
    %cst_36 = arith.constant 0.000000e+00 : f32
    %85 = vector.broadcast %cst_36 : f32 to vector<1x1024xf32>
    %86 = arith.select %18, %84, %85 : vector<1x1024xi1>, vector<1x1024xf32>
    %87 = arith.addf %82, %86 : vector<1x1024xf32>
    %88 = vector.extract_strided_slice %45 {offsets = [8, 0], sizes = [1, 1024], strides = [1, 1]} : vector<16x1024xf32> to vector<1x1024xf32>
    %c1007_i32 = arith.constant 1007 : i32
    %89 = tpu.dynamic_rotate %88 by %c1007_i32 dim 1 : vector<1x1024xf32>, i32 -> vector<1x1024xf32>
    %90 = arith.andi %18, %22 : vector<1x1024xi1>
    %cst_37 = arith.constant 0.000000e+00 : f32
    %91 = vector.broadcast %cst_37 : f32 to vector<1x1024xf32>
    %92 = arith.select %90, %89, %91 : vector<1x1024xi1>, vector<1x1024xf32>
    %93 = arith.addf %87, %92 : vector<1x1024xf32>
    %cst_38 = arith.constant 0.000000e+00 : f32
    %94 = vector.broadcast %cst_38 : f32 to vector<1x1024xf32>
    %95 = arith.subf %94, %93 : vector<1x1024xf32>
    %96 = math.exp %95 : vector<1x1024xf32>
    %cst_39 = arith.constant 1.000000e+00 : f32
    %97 = vector.broadcast %cst_39 : f32 to vector<1x1024xf32>
    %98 = arith.addf %97, %96 : vector<1x1024xf32>
    %99 = tpu.reciprocal %98 {approx = true} : vector<1x1024xf32> -> vector<1x1024xf32>
    %100 = vector.broadcast %99 : vector<1x1024xf32> to vector<32x1024xf32>
    %101 = arith.mulf %42, %100 : vector<32x1024xf32>
    %102 = arith.truncf %101 : vector<32x1024xf32> to vector<32x1024xbf16>
    %c0_40 = arith.constant 0 : index
    %c0_41 = arith.constant 0 : index
    %103 = vector.load %arg11[%c0_40, %c0_41] : memref<32x128xbf16, #tpu.memory_space<vmem>>, vector<32x128xbf16>
    %104 = vector.extract_strided_slice %102 {offsets = [0, 0], sizes = [32, 256], strides = [1, 1]} : vector<32x1024xbf16> to vector<32x256xbf16>
    %105 = vector.extract_strided_slice %102 {offsets = [0, 256], sizes = [32, 256], strides = [1, 1]} : vector<32x1024xbf16> to vector<32x256xbf16>
    %106 = vector.extract_strided_slice %102 {offsets = [0, 512], sizes = [32, 256], strides = [1, 1]} : vector<32x1024xbf16> to vector<32x256xbf16>
    %107 = vector.extract_strided_slice %102 {offsets = [0, 768], sizes = [32, 256], strides = [1, 1]} : vector<32x1024xbf16> to vector<32x256xbf16>
    %108 = tpu.concatenate %104, %105, %106, %107 in 0 : vector<32x256xbf16>, vector<32x256xbf16>, vector<32x256xbf16>, vector<32x256xbf16> -> vector<128x256xbf16>
    %cst_42 = arith.constant dense<0.000000e+00> : vector<32x256xf32>
    %109 = tpu.matmul %103, %108, %cst_42 {dimension_numbers = #tpu.dot_dimension_numbers<[1], [0], [0], [1], [0, 0, 1, 1], [], []>} : vector<32x128xbf16>, vector<128x256xbf16>, vector<32x256xf32> -> vector<32x256xf32>
    %c0_43 = arith.constant 0 : index
    %c0_44 = arith.constant 0 : index
    %110 = vector.load %arg12[%c0_43, %c0_44] : memref<32x1xf32, #tpu.memory_space<vmem>>, vector<32x1xf32>
    %111 = vector.broadcast %110 : vector<32x1xf32> to vector<32x256xf32>
    %112 = arith.addf %109, %111 : vector<32x256xf32>
    %113 = arith.truncf %112 : vector<32x256xf32> to vector<32x256xbf16>
    %c0_45 = arith.constant 0 : index
    %c0_46 = arith.constant 0 : index
    %c0_47 = arith.constant 0 : index
    %114 = vector.load %arg13[%c0_45, %c0_46, %c0_47] : memref<1x32x256xbf16, #tpu.memory_space<vmem>>, vector<1x32x256xbf16>
    %115 = vector.shape_cast %114 : vector<1x32x256xbf16> to vector<32x256xbf16>
    %116 = vector.shape_cast %113 : vector<32x256xbf16> to vector<1x32x256xbf16>
    tpu.vector_store %arg13[%c0_45, %c0_46, %c0_47], %116 {strides = array<i32>} : memref<1x32x256xbf16, #tpu.memory_space<vmem>>, vector<1x32x256xbf16>,
    return
  }
  func.func @transform_0(%arg0: i32) -> (i32, i32, i32) {
    %c0_i32 = arith.constant 0 : i32
    %c0_i32_0 = arith.constant 0 : i32
    %c0_i32_1 = arith.constant 0 : i32
    return %arg0, %c0_i32, %c0_i32_0 : i32, i32, i32
  }
  func.func @transform_1(%arg0: i32) -> (i32, i32, i32) {
    %c0_i32 = arith.constant 0 : i32
    %c0_i32_0 = arith.constant 0 : i32
    %c0_i32_1 = arith.constant 0 : i32
    return %arg0, %c0_i32, %c0_i32_0 : i32, i32, i32
  }
  func.func @transform_2(%arg0: i32) -> (i32, i32, i32) {
    %c0_i32 = arith.constant 0 : i32
    %c0_i32_0 = arith.constant 0 : i32
    %c0_i32_1 = arith.constant 0 : i32
    return %arg0, %c0_i32, %c0_i32_0 : i32, i32, i32
  }
  func.func @transform_3(%arg0: i32) -> (i32, i32, i32) {
    %c0_i32 = arith.constant 0 : i32
    %c0_i32_0 = arith.constant 0 : i32
    %c0_i32_1 = arith.constant 0 : i32
    return %arg0, %c0_i32, %c0_i32_0 : i32, i32, i32
  }
  func.func @transform_4(%arg0: i32) -> (i32, i32) {
    %c0_i32 = arith.constant 0 : i32
    %c0_i32_0 = arith.constant 0 : i32
    %c0_i32_1 = arith.constant 0 : i32
    return %c0_i32, %c0_i32_0 : i32, i32
  }
  func.func @transform_5(%arg0: i32) -> (i32, i32) {
    %c0_i32 = arith.constant 0 : i32
    %c0_i32_0 = arith.constant 0 : i32
    %c0_i32_1 = arith.constant 0 : i32
    return %c0_i32, %c0_i32_0 : i32, i32
  }
  func.func @transform_6(%arg0: i32) -> (i32, i32) {
    %c0_i32 = arith.constant 0 : i32
    %c0_i32_0 = arith.constant 0 : i32
    %c0_i32_1 = arith.constant 0 : i32
    return %c0_i32, %c0_i32_0 : i32, i32
  }
  func.func @transform_7(%arg0: i32) -> (i32, i32) {
    %c0_i32 = arith.constant 0 : i32
    %c0_i32_0 = arith.constant 0 : i32
    %c0_i32_1 = arith.constant 0 : i32
    return %c0_i32, %c0_i32_0 : i32, i32
  }
  func.func @transform_8(%arg0: i32) -> (i32, i32) {
    %c0_i32 = arith.constant 0 : i32
    %c0_i32_0 = arith.constant 0 : i32
    %c0_i32_1 = arith.constant 0 : i32
    return %c0_i32, %c0_i32_0 : i32, i32
  }
  func.func @transform_9(%arg0: i32) -> i32 {
    %c0_i32 = arith.constant 0 : i32
    %c0_i32_0 = arith.constant 0 : i32
    return %c0_i32 : i32
  }
  func.func @transform_10(%arg0: i32) -> (i32, i32) {
    %c0_i32 = arith.constant 0 : i32
    %c0_i32_0 = arith.constant 0 : i32
    %c0_i32_1 = arith.constant 0 : i32
    return %c0_i32, %c0_i32_0 : i32, i32
  }
  func.func @transform_11(%arg0: i32) -> (i32, i32) {
    %c0_i32 = arith.constant 0 : i32
    %c0_i32_0 = arith.constant 0 : i32
    %c0_i32_1 = arith.constant 0 : i32
    return %c0_i32, %c0_i32_0 : i32, i32
  }
  func.func @transform_12(%arg0: i32) -> (i32, i32, i32) {
    %c0_i32 = arith.constant 0 : i32
    %c0_i32_0 = arith.constant 0 : i32
    %c0_i32_1 = arith.constant 0 : i32
    return %arg0, %c0_i32, %c0_i32_0 : i32, i32, i32
  }
}

</mosaic_0001>

<llo_original>
// kernel: tpu_custom_call.1
$region0: #{tpu_custom_call.1}
  #allocation0 [shape = 'u32[]', space=smem, size = 0x4, offset = 0x4, fixed_abs, tag = 'smem constant byte address 0x4 - core index']
  #allocation1 [shape = 'u32[144,128]{1,0:T(1,128)}', space=vmem, size = 0x12000, scoped, tag = 'internal scratch']
  #allocation2 [shape = 'f32[1]{0:T(128)S(6)}', space=smem, size = 0x200, scoped, tag = 'scoped memory for tpu_custom_call.1']
  %s0 = inlined_call_operand.vmem [shape: bf16[2,32,256], index: 0, kind: input, shape index: {}]
  %s1 = inlined_call_operand.hbm [shape: bf16[2,32,256], index: 1, kind: input, shape index: {}]
  %s2 = inlined_call_operand.hbm [shape: bf16[2,32,256], index: 2, kind: input, shape index: {}]
  %s3 = inlined_call_operand.hbm [shape: bf16[2,32,256], index: 3, kind: input, shape index: {}]
  %s4 = inlined_call_operand.vmem [shape: bf16[8,32], index: 4, kind: input, shape index: {}]
  %s5 = inlined_call_operand.vmem [shape: f32[8,1], index: 5, kind: input, shape index: {}]
  %s6 = inlined_call_operand.vmem [shape: bf16[32,8], index: 6, kind: input, shape index: {}]
  %s7 = inlined_call_operand.vmem [shape: f32[32,1], index: 7, kind: input, shape index: {}]
  %s8 = inlined_call_operand.vmem [shape: bf16[16,32], index: 8, kind: input, shape index: {}]
  %s9 = inlined_call_operand.<no memory space> [shape: f32[1], index: 9, kind: input, shape index: {}]
  %s10 = inlined_call_operand.vmem [shape: bf16[32,128], index: 10, kind: input, shape index: {}]
  %s11 = inlined_call_operand.vmem [shape: f32[32,1], index: 11, kind: input, shape index: {}]
  %s12 = inlined_call_operand.hbm [shape: bf16[2,32,256], index: 12, kind: output, shape index: {}]
  %s13 = sld [smem:[#allocation0]]
  $region93: #{tpu_custom_call.1} parent=0
    _
  %s15 = ssub.s32 1, %s13
  %s16 = scalar_select 0, %s15, %s13
  %17 = sst [smem:[#allocation2]] %s9
  $region1: #{tpu_custom_call.1} parent=0
    #allocation3 [shape = 'u8[32768]{0}', space=vmem, size = 0x8000, scoped, tag = 'input window, operand 1']
    #allocation4 [shape = 's32[2]{0}', space=sflag, size = 0x8, scoped, tag = 'scoped memory for tpu_custom_call.1']
    #allocation5 [shape = 's32[2]{0}', space=sflag, size = 0x8, scoped, tag = 'scoped memory for tpu_custom_call.1']
    #allocation6 [shape = 'u8[32768]{0}', space=vmem, size = 0x8000, scoped, tag = 'input window, operand 2']
    #allocation7 [shape = 's32[2]{0}', space=sflag, size = 0x8, scoped, tag = 'scoped memory for tpu_custom_call.1']
    #allocation8 [shape = 'u8[32768]{0}', space=vmem, size = 0x8000, scoped, tag = 'input window, operand 3']
    #allocation9 [shape = 'u8[32768]{0}', space=vmem, size = 0x8000, scoped, tag = 'output window, operand 0']
    %18 = vsyncpa [#allocation4], 0
    %s19 = scalar_lea.sflag [#allocation4], 1
    %20 = vsyncpa %s19, 0
    %21 = vsyncpa [#allocation7], 0
    %s22 = scalar_lea.sflag [#allocation7], 1
    %23 = vsyncpa %s22, 0
    %24 = vsyncpa [#allocation5], 0
    %s25 = scalar_lea.sflag [#allocation5], 1
    %26 = vsyncpa %s25, 0
    loop: start=0, step=1, limit=4
    $region2: #{tpu_custom_call.1} parent=1 // loop_pre_header
      _
    $region3: #{tpu_custom_call.1} parent=1 // loop_header
      %s28 = sphi 0, %s32
      %p29 = scmp.ge.s32.totalorder %s28, 4
      %s38 = sphi 0, %s40
      %s41 = sphi 0, %s38
      %s42 = sphi 0, %s41
      %s58 = sphi 0, %s42
      %s64 = sphi 0, %s66
      %s67 = sphi 0, %s64
      %s68 = sphi 0, %s67
      %s84 = sphi 0, %s68
      %s90 = sphi 0, %s92
      %s93 = sphi 0, %s90
      %s94 = sphi 0, %s93
      %s110 = sphi 0, %s94
      %s116 = sphi 0, %s118
      %s119 = sphi 0, %s116
      %s120 = sphi 0, %s119
      %s136 = sphi 0, %s120
      %s140 = sphi 0, %s140
      %s142 = sphi 0, %s140
      %s143 = sphi 0, %s142
      %s157 = sphi 0, %s143
      %s161 = sphi 0, %s161
      %s163 = sphi 0, %s161
      %s164 = sphi 0, %s163
      %s178 = sphi 0, %s164
      %s182 = sphi 0, %s182
      %s184 = sphi 0, %s182
      %s185 = sphi 0, %s184
      %s199 = sphi 0, %s185
      %s203 = sphi 0, %s203
      %s205 = sphi 0, %s203
      %s206 = sphi 0, %s205
      %s220 = sphi 0, %s206
      %s224 = sphi 0, %s224
      %s226 = sphi 0, %s224
      %s227 = sphi 0, %s226
      %s241 = sphi 0, %s227
      %s245 = sphi 0, %s245
      %s247 = sphi 0, %s245
      %s248 = sphi 0, %s247
      %s262 = sphi 0, %s248
      %s266 = sphi 0, %s266
      %s268 = sphi 0, %s266
      %s269 = sphi 0, %s268
      %s283 = sphi 0, %s269
      %s287 = sphi 0, %s287
      %s289 = sphi 0, %s287
      %s290 = sphi 0, %s289
      %s304 = sphi 0, %s290
      %s310 = sphi 0, %s312
      %s313 = sphi 0, %s310
      %s314 = sphi 0, %s313
      %s330 = sphi 0, %s314
    $region4: #{tpu_custom_call.1} parent=1 // loop_header_branch
      %31 = sbr.rel (%p29) target = $region8
    $region5: #{tpu_custom_call.1} parent=1 // loop_body
      %s33 = ssub.s32 %s28, 1
      %s34 = ssub.s32 %s28, 2
      %s35 = sadd.s32 %s28, 1
      %s36 = ssub.s32 %s28, %s35
      %p37 = scmp.eq.s32.totalorder %s36, 0
      %s39 = sadd.s32 %s38, 1
      %s40 = scalar_select %p37, %s38, %s39
      %p43 = pneg %p37
      %p44 = scmp.eq.s32.totalorder %s28, 1
      %p45 = por %p43, %p44
      %p46 = scmp.ne.s32.totalorder %s38, %s41
      %p47 = scmp.eq.s32.totalorder %s28, 0
      %p48 = por %p46, %p47
      %p49 = scmp.ne.s32.totalorder %s38, %s41
      %p50 = scmp.eq.s32.totalorder %s33, 1
      %p51 = por %p49, %p50
      %p52 = scmp.ne.s32.totalorder %s41, %s42
      %p53 = scmp.eq.s32.totalorder %s33, 0
      %p54 = por %p52, %p53
      %p55 = scmp.ne.s32.totalorder %s41, %s42
      %p56 = scmp.eq.s32.totalorder %s34, 1
      %p57 = por %p55, %p56
      %p59 = scmp.ne.s32.totalorder %s42, %s58
      %p60 = scmp.eq.s32.totalorder %s34, 0
      %p61 = por %p59, %p60
      %s62 = ssub.s32 %s28, %s35
      %p63 = scmp.eq.s32.totalorder %s62, 0
      %s65 = sadd.s32 %s64, 1
      %s66 = scalar_select %p63, %s64, %s65
      %p69 = pneg %p63
      %p70 = scmp.eq.s32.totalorder %s28, 1
      %p71 = por %p69, %p70
      %p72 = scmp.ne.s32.totalorder %s64, %s67
      %p73 = scmp.eq.s32.totalorder %s28, 0
      %p74 = por %p72, %p73
      %p75 = scmp.ne.s32.totalorder %s64, %s67
      %p76 = scmp.eq.s32.totalorder %s33, 1
      %p77 = por %p75, %p76
      %p78 = scmp.ne.s32.totalorder %s67, %s68
      %p79 = scmp.eq.s32.totalorder %s33, 0
      %p80 = por %p78, %p79
      %p81 = scmp.ne.s32.totalorder %s67, %s68
      %p82 = scmp.eq.s32.totalorder %s34, 1
      %p83 = por %p81, %p82
      %p85 = scmp.ne.s32.totalorder %s68, %s84
      %p86 = scmp.eq.s32.totalorder %s34, 0
      %p87 = por %p85, %p86
      %s88 = ssub.s32 %s28, %s35
      %p89 = scmp.eq.s32.totalorder %s88, 0
      %s91 = sadd.s32 %s90, 1
      %s92 = scalar_select %p89, %s90, %s91
      %p95 = pneg %p89
      %p96 = scmp.eq.s32.totalorder %s28, 1
      %p97 = por %p95, %p96
      %p98 = scmp.ne.s32.totalorder %s90, %s93
      %p99 = scmp.eq.s32.totalorder %s28, 0
      %p100 = por %p98, %p99
      %p101 = scmp.ne.s32.totalorder %s90, %s93
      %p102 = scmp.eq.s32.totalorder %s33, 1
      %p103 = por %p101, %p102
      %p104 = scmp.ne.s32.totalorder %s93, %s94
      %p105 = scmp.eq.s32.totalorder %s33, 0
      %p106 = por %p104, %p105
      %p107 = scmp.ne.s32.totalorder %s93, %s94
      %p108 = scmp.eq.s32.totalorder %s34, 1
      %p109 = por %p107, %p108
      %p111 = scmp.ne.s32.totalorder %s94, %s110
      %p112 = scmp.eq.s32.totalorder %s34, 0
      %p113 = por %p111, %p112
      %s114 = ssub.s32 %s28, %s35
      %p115 = scmp.eq.s32.totalorder %s114, 0
      %s117 = sadd.s32 %s116, 1
      %s118 = scalar_select %p115, %s116, %s117
      %p121 = pneg %p115
      %p122 = scmp.eq.s32.totalorder %s28, 1
      %p123 = por %p121, %p122
      %p124 = scmp.ne.s32.totalorder %s116, %s119
      %p125 = scmp.eq.s32.totalorder %s28, 0
      %p126 = por %p124, %p125
      %p127 = scmp.ne.s32.totalorder %s116, %s119
      %p128 = scmp.eq.s32.totalorder %s33, 1
      %p129 = por %p127, %p128
      %p130 = scmp.ne.s32.totalorder %s119, %s120
      %p131 = scmp.eq.s32.totalorder %s33, 0
      %p132 = por %p130, %p131
      %p133 = scmp.ne.s32.totalorder %s119, %s120
      %p134 = scmp.eq.s32.totalorder %s34, 1
      %p135 = por %p133, %p134
      %p137 = scmp.ne.s32.totalorder %s120, %s136
      %p138 = scmp.eq.s32.totalorder %s34, 0
      %p139 = por %p137, %p138
      %s141 = sadd.s32 %s140, 1
      %p144 = scmp.eq.s32.totalorder %s28, 1
      %p145 = scmp.ne.s32.totalorder %s140, %s142
      %p146 = scmp.eq.s32.totalorder %s28, 0
      %p147 = por %p145, %p146
      %p148 = scmp.ne.s32.totalorder %s140, %s142
      %p149 = scmp.eq.s32.totalorder %s33, 1
      %p150 = por %p148, %p149
      %p151 = scmp.ne.s32.totalorder %s142, %s143
      %p152 = scmp.eq.s32.totalorder %s33, 0
      %p153 = por %p151, %p152
      %p154 = scmp.ne.s32.totalorder %s142, %s143
      %p155 = scmp.eq.s32.totalorder %s34, 1
      %p156 = por %p154, %p155
      %p158 = scmp.ne.s32.totalorder %s143, %s157
      %p159 = scmp.eq.s32.totalorder %s34, 0
      %p160 = por %p158, %p159
      %s162 = sadd.s32 %s161, 1
      %p165 = scmp.eq.s32.totalorder %s28, 1
      %p166 = scmp.ne.s32.totalorder %s161, %s163
      %p167 = scmp.eq.s32.totalorder %s28, 0
      %p168 = por %p166, %p167
      %p169 = scmp.ne.s32.totalorder %s161, %s163
      %p170 = scmp.eq.s32.totalorder %s33, 1
      %p171 = por %p169, %p170
      %p172 = scmp.ne.s32.totalorder %s163, %s164
      %p173 = scmp.eq.s32.totalorder %s33, 0
      %p174 = por %p172, %p173
      %p175 = scmp.ne.s32.totalorder %s163, %s164
      %p176 = scmp.eq.s32.totalorder %s34, 1
      %p177 = por %p175, %p176
      %p179 = scmp.ne.s32.totalorder %s164, %s178
      %p180 = scmp.eq.s32.totalorder %s34, 0
      %p181 = por %p179, %p180
      %s183 = sadd.s32 %s182, 1
      %p186 = scmp.eq.s32.totalorder %s28, 1
      %p187 = scmp.ne.s32.totalorder %s182, %s184
      %p188 = scmp.eq.s32.totalorder %s28, 0
      %p189 = por %p187, %p188
      %p190 = scmp.ne.s32.totalorder %s182, %s184
      %p191 = scmp.eq.s32.totalorder %s33, 1
      %p192 = por %p190, %p191
      %p193 = scmp.ne.s32.totalorder %s184, %s185
      %p194 = scmp.eq.s32.totalorder %s33, 0
      %p195 = por %p193, %p194
      %p196 = scmp.ne.s32.totalorder %s184, %s185
      %p197 = scmp.eq.s32.totalorder %s34, 1
      %p198 = por %p196, %p197
      %p200 = scmp.ne.s32.totalorder %s185, %s199
      %p201 = scmp.eq.s32.totalorder %s34, 0
      %p202 = por %p200, %p201
      %s204 = sadd.s32 %s203, 1
      %p207 = scmp.eq.s32.totalorder %s28, 1
      %p208 = scmp.ne.s32.totalorder %s203, %s205
      %p209 = scmp.eq.s32.totalorder %s28, 0
      %p210 = por %p208, %p209
      %p211 = scmp.ne.s32.totalorder %s203, %s205
      %p212 = scmp.eq.s32.totalorder %s33, 1
      %p213 = por %p211, %p212
      %p214 = scmp.ne.s32.totalorder %s205, %s206
      %p215 = scmp.eq.s32.totalorder %s33, 0
      %p216 = por %p214, %p215
      %p217 = scmp.ne.s32.totalorder %s205, %s206
      %p218 = scmp.eq.s32.totalorder %s34, 1
      %p219 = por %p217, %p218
      %p221 = scmp.ne.s32.totalorder %s206, %s220
      %p222 = scmp.eq.s32.totalorder %s34, 0
      %p223 = por %p221, %p222
      %s225 = sadd.s32 %s224, 1
      %p228 = scmp.eq.s32.totalorder %s28, 1
      %p229 = scmp.ne.s32.totalorder %s224, %s226
      %p230 = scmp.eq.s32.totalorder %s28, 0
      %p231 = por %p229, %p230
      %p232 = scmp.ne.s32.totalorder %s224, %s226
      %p233 = scmp.eq.s32.totalorder %s33, 1
      %p234 = por %p232, %p233
      %p235 = scmp.ne.s32.totalorder %s226, %s227
      %p236 = scmp.eq.s32.totalorder %s33, 0
      %p237 = por %p235, %p236
      %p238 = scmp.ne.s32.totalorder %s226, %s227
      %p239 = scmp.eq.s32.totalorder %s34, 1
      %p240 = por %p238, %p239
      %p242 = scmp.ne.s32.totalorder %s227, %s241
      %p243 = scmp.eq.s32.totalorder %s34, 0
      %p244 = por %p242, %p243
      %s246 = sadd.s32 %s245, 1
      %p249 = scmp.eq.s32.totalorder %s28, 1
      %p250 = scmp.ne.s32.totalorder %s245, %s247
      %p251 = scmp.eq.s32.totalorder %s28, 0
      %p252 = por %p250, %p251
      %p253 = scmp.ne.s32.totalorder %s245, %s247
      %p254 = scmp.eq.s32.totalorder %s33, 1
      %p255 = por %p253, %p254
      %p256 = scmp.ne.s32.totalorder %s247, %s248
      %p257 = scmp.eq.s32.totalorder %s33, 0
      %p258 = por %p256, %p257
      %p259 = scmp.ne.s32.totalorder %s247, %s248
      %p260 = scmp.eq.s32.totalorder %s34, 1
      %p261 = por %p259, %p260
      %p263 = scmp.ne.s32.totalorder %s248, %s262
      %p264 = scmp.eq.s32.totalorder %s34, 0
      %p265 = por %p263, %p264
      %s267 = sadd.s32 %s266, 1
      %p270 = scmp.eq.s32.totalorder %s28, 1
      %p271 = scmp.ne.s32.totalorder %s266, %s268
      %p272 = scmp.eq.s32.totalorder %s28, 0
      %p273 = por %p271, %p272
      %p274 = scmp.ne.s32.totalorder %s266, %s268
      %p275 = scmp.eq.s32.totalorder %s33, 1
      %p276 = por %p274, %p275
      %p277 = scmp.ne.s32.totalorder %s268, %s269
      %p278 = scmp.eq.s32.totalorder %s33, 0
      %p279 = por %p277, %p278
      %p280 = scmp.ne.s32.totalorder %s268, %s269
      %p281 = scmp.eq.s32.totalorder %s34, 1
      %p282 = por %p280, %p281
      %p284 = scmp.ne.s32.totalorder %s269, %s283
      %p285 = scmp.eq.s32.totalorder %s34, 0
      %p286 = por %p284, %p285
      %s288 = sadd.s32 %s287, 1
      %p291 = scmp.eq.s32.totalorder %s28, 1
      %p292 = scmp.ne.s32.totalorder %s287, %s289
      %p293 = scmp.eq.s32.totalorder %s28, 0
      %p294 = por %p292, %p293
      %p295 = scmp.ne.s32.totalorder %s287, %s289
      %p296 = scmp.eq.s32.totalorder %s33, 1
      %p297 = por %p295, %p296
      %p298 = scmp.ne.s32.totalorder %s289, %s290
      %p299 = scmp.eq.s32.totalorder %s33, 0
      %p300 = por %p298, %p299
      %p301 = scmp.ne.s32.totalorder %s289, %s290
      %p302 = scmp.eq.s32.totalorder %s34, 1
      %p303 = por %p301, %p302
      %p305 = scmp.ne.s32.totalorder %s290, %s304
      %p306 = scmp.eq.s32.totalorder %s34, 0
      %p307 = por %p305, %p306
      %s308 = ssub.s32 %s28, %s35
      %p309 = scmp.eq.s32.totalorder %s308, 0
      %s311 = sadd.s32 %s310, 1
      %s312 = scalar_select %p309, %s310, %s311
      %p315 = pneg %p309
      %p316 = scmp.eq.s32.totalorder %s28, 1
      %p317 = por %p315, %p316
      %p318 = scmp.ne.s32.totalorder %s310, %s313
      %p319 = scmp.eq.s32.totalorder %s28, 0
      %p320 = por %p318, %p319
      %p321 = scmp.ne.s32.totalorder %s310, %s313
      %p322 = scmp.eq.s32.totalorder %s33, 1
      %p323 = por %p321, %p322
      %p324 = scmp.ne.s32.totalorder %s313, %s314
      %p325 = scmp.eq.s32.totalorder %s33, 0
      %p326 = por %p324, %p325
      %p327 = scmp.ne.s32.totalorder %s313, %s314
      %p328 = scmp.eq.s32.totalorder %s34, 1
      %p329 = por %p327, %p328
      %p331 = scmp.ne.s32.totalorder %s314, %s330
      %p332 = scmp.eq.s32.totalorder %s34, 0
      %p333 = por %p331, %p332
      %p334 = scmp.le.s32.totalorder 1, %s28
      %p335 = scmp.lt.s32.totalorder %s28, 3
      %p336 = pnand %p334, %p335
      %p337 = pneg %p336
      // Predicated region
      $region9: #{tpu_custom_call.1} parent=5 // pred_check
        _
      $region10: #{tpu_custom_call.1} parent=5 // pred_check_branch
        %339 = sbr.rel (%p336) target = $region12
      $region11: #{tpu_custom_call.1} parent=5 // pred_region
        %s340 = ssub.s32 %s28, 1
        // Predicated region
        $region13: #{tpu_custom_call.1} parent=11 // pred_check
          %p341 = pneg %p153
        $region14: #{tpu_custom_call.1} parent=11 // pred_check_branch
          %343 = sbr.rel (%p341) target = $region16
        $region15: #{tpu_custom_call.1} parent=11 // pred_region
          _
        $region16: #{tpu_custom_call.1} parent=11 // pred_fallthru
          _
        // Predicated region
        $region17: #{tpu_custom_call.1} parent=11 // pred_check
          %p344 = pneg %p174
        $region18: #{tpu_custom_call.1} parent=11 // pred_check_branch
          %346 = sbr.rel (%p344) target = $region20
        $region19: #{tpu_custom_call.1} parent=11 // pred_region
          _
        $region20: #{tpu_custom_call.1} parent=11 // pred_fallthru
          _
        // Predicated region
        $region21: #{tpu_custom_call.1} parent=11 // pred_check
          %p347 = pneg %p195
        $region22: #{tpu_custom_call.1} parent=11 // pred_check_branch
          %349 = sbr.rel (%p347) target = $region24
        $region23: #{tpu_custom_call.1} parent=11 // pred_region
          _
        $region24: #{tpu_custom_call.1} parent=11 // pred_fallthru
          _
        // Predicated region
        $region25: #{tpu_custom_call.1} parent=11 // pred_check
          %p350 = pneg %p216
        $region26: #{tpu_custom_call.1} parent=11 // pred_check_branch
          %352 = sbr.rel (%p350) target = $region28
        $region27: #{tpu_custom_call.1} parent=11 // pred_region
          _
        $region28: #{tpu_custom_call.1} parent=11 // pred_fallthru
          _
        // Predicated region
        $region29: #{tpu_custom_call.1} parent=11 // pred_check
          %p353 = pneg %p237
        $region30: #{tpu_custom_call.1} parent=11 // pred_check_branch
          %355 = sbr.rel (%p353) target = $region32
        $region31: #{tpu_custom_call.1} parent=11 // pred_region
          _
        $region32: #{tpu_custom_call.1} parent=11 // pred_fallthru
          _
        // Predicated region
        $region33: #{tpu_custom_call.1} parent=11 // pred_check
          %p356 = pneg %p258
        $region34: #{tpu_custom_call.1} parent=11 // pred_check_branch
          %358 = sbr.rel (%p356) target = $region36
        $region35: #{tpu_custom_call.1} parent=11 // pred_region
          _
        $region36: #{tpu_custom_call.1} parent=11 // pred_fallthru
          _
        // Predicated region
        $region37: #{tpu_custom_call.1} parent=11 // pred_check
          %p359 = pneg %p279
        $region38: #{tpu_custom_call.1} parent=11 // pred_check_branch
          %361 = sbr.rel (%p359) target = $region40
        $region39: #{tpu_custom_call.1} parent=11 // pred_region
          _
        $region40: #{tpu_custom_call.1} parent=11 // pred_fallthru
          _
        // Predicated region
        $region41: #{tpu_custom_call.1} parent=11 // pred_check
          %p362 = pneg %p300
        $region42: #{tpu_custom_call.1} parent=11 // pred_check_branch
          %364 = sbr.rel (%p362) target = $region44
        $region43: #{tpu_custom_call.1} parent=11 // pred_region
          _
        $region44: #{tpu_custom_call.1} parent=11 // pred_fallthru
          _
      $region12: #{tpu_custom_call.1} parent=5 // pred_fallthru
        _
      %p365 = scmp.lt.s32.totalorder %s28, 2
      // Predicated region
      $region45: #{tpu_custom_call.1} parent=5 // pred_check
        %p366 = pneg %p365
      $region46: #{tpu_custom_call.1} parent=5 // pred_check_branch
        %368 = sbr.rel (%p366) target = $region48
      $region47: #{tpu_custom_call.1} parent=5 // pred_region
        // Predicated region
        $region49: #{tpu_custom_call.1} parent=47 // pred_check
          %p369 = pneg %p48
        $region50: #{tpu_custom_call.1} parent=47 // pred_check_branch
          %371 = sbr.rel (%p369) target = $region52
        $region51: #{tpu_custom_call.1} parent=47 // pred_region
          %p372 = scmp.lt.s32.totalorder %s28, 1
          %s373 = scalar_select %p372, %s28, 1
          %s374 = smul.addr %s373, 8
          %s375 = smul.addr %s374, 4
          %s376 = scalar_lea.vmem %s0, %s375
        $region52: #{tpu_custom_call.1} parent=47 // pred_fallthru
          _
        // Predicated region
        $region53: #{tpu_custom_call.1} parent=47 // pred_check
          %p377 = pneg %p74
        $region54: #{tpu_custom_call.1} parent=47 // pred_check_branch
          %379 = sbr.rel (%p377) target = $region56
        $region55: #{tpu_custom_call.1} parent=47 // pred_region
          %s380 = sand.u32 %s64, 1
          %s381 = scalar_lea.sflag [#allocation4], %s380
          %s382 = sand.u32 %s64, 1
          %s383 = smul.addr %s382, 32
          %s384 = scalar_lea.vmem [#allocation3], %s383
          %s386 = ssub.s32 512, 512
          %387 = vsyncadd %s381, %s386
          %s388 = smul.addr %s28, 8
          %s389 = smul.addr %s388, 64
          %s390 = scalar_lea.hbm %s1, %s389
          %s391 = sshll.u32 %s384, 4
          %s392 = int_to_ptr.vmem [resolvable:$true] %s391
          %397 = dma.hbm_to_vmem [thread:$0]  %s390, 512, %s392, %s381, 128, 128, 8
        $region56: #{tpu_custom_call.1} parent=47 // pred_fallthru
          _
        // Predicated region
        $region57: #{tpu_custom_call.1} parent=47 // pred_check
          %p398 = pneg %p100
        $region58: #{tpu_custom_call.1} parent=47 // pred_check_branch
          %400 = sbr.rel (%p398) target = $region60
        $region59: #{tpu_custom_call.1} parent=47 // pred_region
          %s401 = sand.u32 %s28, 1
          %s402 = scalar_lea.sflag [#allocation7], %s401
          %s403 = sand.u32 %s90, 1
          %s404 = smul.addr %s403, 32
          %s405 = scalar_lea.vmem [#allocation6], %s404
          %s407 = ssub.s32 512, 512
          %408 = vsyncadd %s402, %s407
          %s409 = smul.addr %s28, 8
          %s410 = smul.addr %s409, 64
          %s411 = scalar_lea.hbm %s2, %s410
          %s412 = sshll.u32 %s405, 4
          %s413 = int_to_ptr.vmem [resolvable:$true] %s412
          %418 = dma.hbm_to_vmem [thread:$0]  %s411, 512, %s413, %s402, 128, 128, 8
        $region60: #{tpu_custom_call.1} parent=47 // pred_fallthru
          _
        // Predicated region
        $region61: #{tpu_custom_call.1} parent=47 // pred_check
          %p419 = pneg %p126
        $region62: #{tpu_custom_call.1} parent=47 // pred_check_branch
          %421 = sbr.rel (%p419) target = $region64
        $region63: #{tpu_custom_call.1} parent=47 // pred_region
          %s422 = sand.u32 %s28, 1
          %s423 = scalar_lea.sflag [#allocation7], %s422
          %s424 = sand.u32 %s116, 1
          %s425 = smul.addr %s424, 32
          %s426 = scalar_lea.vmem [#allocation8], %s425
          %s428 = ssub.s32 512, 512
          %429 = vsyncadd %s423, %s428
          %s430 = smul.addr %s28, 8
          %s431 = smul.addr %s430, 64
          %s432 = scalar_lea.hbm %s3, %s431
          %s433 = sshll.u32 %s426, 4
          %s434 = int_to_ptr.vmem [resolvable:$true] %s433
          %439 = dma.hbm_to_vmem [thread:$0]  %s432, 512, %s434, %s423, 128, 128, 8
        $region64: #{tpu_custom_call.1} parent=47 // pred_fallthru
          _
      $region48: #{tpu_custom_call.1} parent=5 // pred_fallthru
        _
      %p440 = scmp.le.s32.totalorder 1, %s28
      %p441 = scmp.lt.s32.totalorder %s28, 3
      %p442 = pnand %p440, %p441
      %p443 = pneg %p442
      // Predicated region
      $region65: #{tpu_custom_call.1} parent=5 // pred_check
        _
      $region66: #{tpu_custom_call.1} parent=5 // pred_check_branch
        %445 = sbr.rel (%p442) target = $region68
      $region67: #{tpu_custom_call.1} parent=5 // pred_region
        %s446 = ssub.s32 %s28, 1
        %s447 = sand.u32 %s67, 1
        %s448 = scalar_lea.sflag [#allocation4], %s447
        %s449 = sand.u32 %s67, 1
        %s450 = smul.addr %s449, 32
        %s451 = scalar_lea.vmem [#allocation3], %s450
        // Predicated region
        $region69: #{tpu_custom_call.1} parent=67 // pred_check
          %p452 = pneg %p80
        $region70: #{tpu_custom_call.1} parent=67 // pred_check_branch
          %454 = sbr.rel (%p452) target = $region72
        $region71: #{tpu_custom_call.1} parent=67 // pred_region
          %455 = dma.done %s448, 512
        $region72: #{tpu_custom_call.1} parent=67 // pred_fallthru
          _
        %s456 = sand.u32 %s33, 1
        %s457 = scalar_lea.sflag [#allocation7], %s456
        %s458 = sand.u32 %s93, 1
        %s459 = smul.addr %s458, 32
        %s460 = scalar_lea.vmem [#allocation6], %s459
        // Predicated region
        $region73: #{tpu_custom_call.1} parent=67 // pred_check
          %p461 = pneg %p106
        $region74: #{tpu_custom_call.1} parent=67 // pred_check_branch
          %463 = sbr.rel (%p461) target = $region76
        $region75: #{tpu_custom_call.1} parent=67 // pred_region
          %464 = dma.done %s457, 512
        $region76: #{tpu_custom_call.1} parent=67 // pred_fallthru
          _
        %s465 = sand.u32 %s33, 1
        %s466 = scalar_lea.sflag [#allocation7], %s465
        %s467 = sand.u32 %s119, 1
        %s468 = smul.addr %s467, 32
        %s469 = scalar_lea.vmem [#allocation8], %s468
        // Predicated region
        $region77: #{tpu_custom_call.1} parent=67 // pred_check
          %p470 = pneg %p132
        $region78: #{tpu_custom_call.1} parent=67 // pred_check_branch
          %472 = sbr.rel (%p470) target = $region80
        $region79: #{tpu_custom_call.1} parent=67 // pred_region
          %473 = dma.done %s466, 512
        $region80: #{tpu_custom_call.1} parent=67 // pred_fallthru
          _
        %p474 = scmp.lt.s32.totalorder %s33, 1
        %s475 = scalar_select %p474, %s33, 1
        %s476 = smul.addr %s475, 8
        %s477 = smul.addr %s476, 4
        %s478 = scalar_lea.vmem %s0, %s477
        %p479 = pneg %p54
        %p480 = pneg %p51
        %s481 = sand.u32 %s67, 1
        %s482 = scalar_lea.sflag [#allocation4], %s481
        %s483 = sand.u32 %s67, 1
        %s484 = smul.addr %s483, 32
        %s485 = scalar_lea.vmem [#allocation3], %s484
        %p486 = pneg %p80
        %p487 = pneg %p77
        %s488 = sand.u32 %s33, 1
        %s489 = scalar_lea.sflag [#allocation7], %s488
        %s490 = sand.u32 %s93, 1
        %s491 = smul.addr %s490, 32
        %s492 = scalar_lea.vmem [#allocation6], %s491
        %p493 = pneg %p106
        %p494 = pneg %p103
        %s495 = sand.u32 %s33, 1
        %s496 = scalar_lea.sflag [#allocation7], %s495
        %s497 = sand.u32 %s119, 1
        %s498 = smul.addr %s497, 32
        %s499 = scalar_lea.vmem [#allocation8], %s498
        %p500 = pneg %p132
        %p501 = pneg %p129
        %p502 = pneg %p153
        %p503 = pneg %p150
        %p504 = pneg %p174
        %p505 = pneg %p171
        %p506 = pneg %p195
        %p507 = pneg %p192
        %p508 = pneg %p216
        %p509 = pneg %p213
        %p510 = pneg %p237
        %p511 = pneg %p234
        %p512 = pneg %p258
        %p513 = pneg %p255
        %p514 = pneg %p279
        %p515 = pneg %p276
        %p516 = pneg %p300
        %p517 = pneg %p297
        %p518 = pneg %p326
        %p519 = pneg %p323
        %s520 = sand.u32 %s313, 1
        %s521 = scalar_lea.sflag [#allocation5], %s520
        %s522 = sand.u32 %s313, 1
        %s523 = smul.addr %s522, 32
        %s524 = scalar_lea.vmem [#allocation9], %s523
        %p525 = scmp.lt.s32.totalorder %s33, 1
        %s526 = scalar_select %p525, %s33, 1
        %s527 = smul.addr %s526, 8
        %s528 = smul.addr %s527, 4
        %s529 = scalar_lea.vmem %s0, %s528
        %v531 = vld [vmem:[%s529] sm:$0xff]
        %v532 = vld [vmem:[%s529 + $0x8] sm:$0xff]
        %v533 = vld [vmem:[%s529 + $0x10] sm:$0xff]
        %v534 = vld [vmem:[%s529 + $0x18] sm:$0xff]
        %v535 = vld [vmem:[%s451] sm:$0xff]
        %v536 = vld [vmem:[%s451 + $0x8] sm:$0xff]
        %v537 = vld [vmem:[%s451 + $0x10] sm:$0xff]
        %v538 = vld [vmem:[%s451 + $0x18] sm:$0xff]
        %v539 = vld [vmem:[%s460] sm:$0xff]
        %v540 = vld [vmem:[%s460 + $0x8] sm:$0xff]
        %v541 = vld [vmem:[%s460 + $0x10] sm:$0xff]
        %v542 = vld [vmem:[%s460 + $0x18] sm:$0xff]
        %v543 = vld [vmem:[%s469] sm:$0xff]
        %v544 = vld [vmem:[%s469 + $0x8] sm:$0xff]
        %v545 = vld [vmem:[%s469 + $0x10] sm:$0xff]
        %v546 = vld [vmem:[%s469 + $0x18] sm:$0xff]
        %v551 = vunpack.c.l.b16 %v531
        %v552 = vunpack.c.h.b16 %v531
        %v553 = vunpack.c.l.b16 %v532
        %v554 = vunpack.c.h.b16 %v532
        %v555 = vunpack.c.l.b16 %v533
        %v556 = vunpack.c.h.b16 %v533
        %v557 = vunpack.c.l.b16 %v534
        %v558 = vunpack.c.h.b16 %v534
        %v559 = vpack.c.b16 %v553, %v551
        %v560 = vpack.c.b16 %v554, %v552
        %v561 = vpack.c.b16 %v557, %v555
        %v562 = vpack.c.b16 %v558, %v556
        %v571 = vunpack.c.l.b16 %v535
        %v572 = vunpack.c.h.b16 %v535
        %v573 = vunpack.c.l.b16 %v536
        %v574 = vunpack.c.h.b16 %v536
        %v575 = vunpack.c.l.b16 %v537
        %v576 = vunpack.c.h.b16 %v537
        %v577 = vunpack.c.l.b16 %v538
        %v578 = vunpack.c.h.b16 %v538
        %v579 = vpack.c.b16 %v573, %v571
        %v580 = vpack.c.b16 %v574, %v572
        %v581 = vpack.c.b16 %v577, %v575
        %v582 = vpack.c.b16 %v578, %v576
        %v591 = vunpack.c.l.b16 %v539
        %v592 = vunpack.c.h.b16 %v539
        %v593 = vunpack.c.l.b16 %v540
        %v594 = vunpack.c.h.b16 %v540
        %v595 = vunpack.c.l.b16 %v541
        %v596 = vunpack.c.h.b16 %v541
        %v597 = vunpack.c.l.b16 %v542
        %v598 = vunpack.c.h.b16 %v542
        %v599 = vpack.c.b16 %v593, %v591
        %v600 = vpack.c.b16 %v594, %v592
        %v601 = vpack.c.b16 %v597, %v595
        %v602 = vpack.c.b16 %v598, %v596
        %v611 = vunpack.c.l.b16 %v543
        %v612 = vunpack.c.h.b16 %v543
        %v613 = vunpack.c.l.b16 %v544
        %v614 = vunpack.c.h.b16 %v544
        %v615 = vunpack.c.l.b16 %v545
        %v616 = vunpack.c.h.b16 %v545
        %v617 = vunpack.c.l.b16 %v546
        %v618 = vunpack.c.h.b16 %v546
        %v619 = vpack.c.b16 %v613, %v611
        %v620 = vpack.c.b16 %v614, %v612
        %v621 = vpack.c.b16 %v617, %v615
        %v622 = vpack.c.b16 %v618, %v616
        %v627 = vunpack.c.l.bf16 %v559
        %v628 = vunpack.c.l.bf16 %v560
        %v629 = vunpack.c.l.bf16 %v579
        %v630 = vunpack.c.l.bf16 %v580
        %v631 = vunpack.c.l.bf16 %v599
        %v632 = vunpack.c.l.bf16 %v600
        %v633 = vunpack.c.l.bf16 %v619
        %v634 = vunpack.c.l.bf16 %v620
        %v635 = vunpack.c.h.bf16 %v559
        %v636 = vunpack.c.h.bf16 %v560
        %v637 = vunpack.c.h.bf16 %v579
        %v638 = vunpack.c.h.bf16 %v580
        %v639 = vunpack.c.h.bf16 %v599
        %v640 = vunpack.c.h.bf16 %v600
        %v641 = vunpack.c.h.bf16 %v619
        %v642 = vunpack.c.h.bf16 %v620
        %v643 = vunpack.c.l.bf16 %v561
        %v644 = vunpack.c.l.bf16 %v562
        %v645 = vunpack.c.l.bf16 %v581
        %v646 = vunpack.c.l.bf16 %v582
        %v647 = vunpack.c.l.bf16 %v601
        %v648 = vunpack.c.l.bf16 %v602
        %v649 = vunpack.c.l.bf16 %v621
        %v650 = vunpack.c.l.bf16 %v622
        %v651 = vunpack.c.h.bf16 %v561
        %v652 = vunpack.c.h.bf16 %v562
        %v653 = vunpack.c.h.bf16 %v581
        %v654 = vunpack.c.h.bf16 %v582
        %v655 = vunpack.c.h.bf16 %v601
        %v656 = vunpack.c.h.bf16 %v602
        %v657 = vunpack.c.h.bf16 %v621
        %v658 = vunpack.c.h.bf16 %v622
        %v659 = vlaneseq
        %v660 = vand.u32 %v659, 127
        %v661 = vadd.s32 %v660, 128
        %v662 = vadd.s32 %v660, 256
        %v663 = vadd.s32 %v660, 384
        %v664 = vadd.s32 %v660, 512
        %v665 = vadd.s32 %v660, 640
        %v666 = vadd.s32 %v660, 768
        %v667 = vadd.s32 %v660, 896
        %v668 = vand.u32 %v660, 255
        %v669 = vand.u32 %v661, 255
        %v670 = vand.u32 %v662, 255
        %v671 = vand.u32 %v663, 255
        %v672 = vand.u32 %v664, 255
        %v673 = vand.u32 %v665, 255
        %v674 = vand.u32 %v666, 255
        %v675 = vand.u32 %v667, 255
        %v676 = vand.u32 %v668, 15
        %v677 = vand.u32 %v669, 15
        %v678 = vand.u32 %v670, 15
        %v679 = vand.u32 %v671, 15
        %v680 = vand.u32 %v672, 15
        %v681 = vand.u32 %v673, 15
        %v682 = vand.u32 %v674, 15
        %v683 = vand.u32 %v675, 15
        %vm684 = vcmp.ge.s32.totalorder %v668, 16
        %vm685 = vcmp.ge.s32.totalorder %v669, 16
        %vm686 = vcmp.ge.s32.totalorder %v670, 16
        %vm687 = vcmp.ge.s32.totalorder %v671, 16
        %vm688 = vcmp.ge.s32.totalorder %v672, 16
        %vm689 = vcmp.ge.s32.totalorder %v673, 16
        %vm690 = vcmp.ge.s32.totalorder %v674, 16
        %vm691 = vcmp.ge.s32.totalorder %v675, 16
        %vm692 = vcmp.lt.s32.totalorder %v668, 240
        %vm693 = vcmp.lt.s32.totalorder %v669, 240
        %vm694 = vcmp.lt.s32.totalorder %v670, 240
        %vm695 = vcmp.lt.s32.totalorder %v671, 240
        %vm696 = vcmp.lt.s32.totalorder %v672, 240
        %vm697 = vcmp.lt.s32.totalorder %v673, 240
        %vm698 = vcmp.lt.s32.totalorder %v674, 240
        %vm699 = vcmp.lt.s32.totalorder %v675, 240
        %vm700 = vcmp.ge.s32.totalorder %v676, 1
        %vm701 = vcmp.ge.s32.totalorder %v677, 1
        %vm702 = vcmp.ge.s32.totalorder %v678, 1
        %vm703 = vcmp.ge.s32.totalorder %v679, 1
        %vm704 = vcmp.ge.s32.totalorder %v680, 1
        %vm705 = vcmp.ge.s32.totalorder %v681, 1
        %vm706 = vcmp.ge.s32.totalorder %v682, 1
        %vm707 = vcmp.ge.s32.totalorder %v683, 1
        %vm708 = vcmp.le.s32.totalorder %v676, 14
        %vm709 = vcmp.le.s32.totalorder %v677, 14
        %vm710 = vcmp.le.s32.totalorder %v678, 14
        %vm711 = vcmp.le.s32.totalorder %v679, 14
        %vm712 = vcmp.le.s32.totalorder %v680, 14
        %vm713 = vcmp.le.s32.totalorder %v681, 14
        %vm714 = vcmp.le.s32.totalorder %v682, 14
        %vm715 = vcmp.le.s32.totalorder %v683, 14
        %v716 = vld [vmem:[%s4] sm:$0xf]
        %v717 = vld [vmem:[%s5] sm:$0xff]
        %719 = vset.pattern.permute.xlu0 0
        %720 = vperm.xlu0 %719, %v717
        %v721 = vpop.permute.xlu0 %720
        %vm723 = vcmask 261120
        %v725 = vsel %vm723, %v716, 0
        %727 = vmatprep.subr.bf16.mxu0 %v560
        %728 = vmatpush1.bf16.msra.mxu0 %v559
        %729 = vmatprep.subr.bf16.mxu0 %v562
        %730 = vmatpush1.bf16.msra.mxu0 %v561
        %731 = vmatprep.subr.bf16.mxu0 0
        %732 = vmatpush1.bf16.msra.mxu0 0
        %733 = vmatprep.subr.bf16.mxu0 0
        %734 = vmatpush1.bf16.msra.mxu0 0
        %735 = vmatprep.subr.bf16.mxu0 0
        %736 = vmatpush1.bf16.msra.mxu0 0
        %737 = vmatprep.subr.bf16.mxu0 0
        %738 = vmatpush1.bf16.msra.mxu0 0
        %739 = vmatprep.subr.bf16.mxu0 0
        %740 = vmatpush1.bf16.msra.mxu0 0
        %741 = vmatprep.subr.bf16.mxu0 0
        %742 = vmatpush1.bf16.msra.mxu0 0
        %743 = vmatprep.subr.bf16.mxu0 0
        %744 = vmatpush1.bf16.msra.mxu0 0
        %745 = vmatprep.subr.bf16.mxu0 0
        %746 = vmatpush1.bf16.msra.mxu0 0
        %747 = vmatprep.subr.bf16.mxu0 0
        %748 = vmatpush1.bf16.msra.mxu0 0
        %749 = vmatprep.subr.bf16.mxu0 0
        %750 = vmatpush1.bf16.msra.mxu0 0
        %751 = vmatprep.subr.bf16.mxu0 0
        %752 = vmatpush1.bf16.msra.mxu0 0
        %753 = vmatprep.subr.bf16.mxu0 0
        %754 = vmatpush1.bf16.msra.mxu0 0
        %755 = vmatprep.subr.bf16.mxu0 0
        %756 = vmatpush1.bf16.msra.mxu0 0
        %757 = vmatprep.subr.bf16.mxu0 0
        %758 = vmatpush1.bf16.msra.mxu0 0
        %759 = vmatprep.mubr.bf16.mxu0 0
        %760 = vmatmul.mubr.bf16.gmra.mrb[0].mxu0 %v725
        %v761 = vpop.f32.mrb[0].mxu0
        %v762 = vadd.f32 %v721, %v761
        %v763 = vpop.f32.mrb[0].mxu0
        %v764 = vadd.f32 %v721, %v763
        %v765 = vpop.f32.mrb[0].mxu0
        %v766 = vpop.f32.mrb[0].mxu0
        %767 = vdwg.mxu0
        %768 = vmatprep.subr.bf16.mxu0 %v580
        %769 = vmatpush1.bf16.msra.mxu0 %v579
        %770 = vmatprep.subr.bf16.mxu0 %v582
        %771 = vmatpush1.bf16.msra.mxu0 %v581
        %772 = vmatprep.subr.bf16.mxu0 0
        %773 = vmatpush1.bf16.msra.mxu0 0
        %774 = vmatprep.subr.bf16.mxu0 0
        %775 = vmatpush1.bf16.msra.mxu0 0
        %776 = vmatprep.subr.bf16.mxu0 0
        %777 = vmatpush1.bf16.msra.mxu0 0
        %778 = vmatprep.subr.bf16.mxu0 0
        %779 = vmatpush1.bf16.msra.mxu0 0
        %780 = vmatprep.subr.bf16.mxu0 0
        %781 = vmatpush1.bf16.msra.mxu0 0
        %782 = vmatprep.subr.bf16.mxu0 0
        %783 = vmatpush1.bf16.msra.mxu0 0
        %784 = vmatprep.subr.bf16.mxu0 0
        %785 = vmatpush1.bf16.msra.mxu0 0
        %786 = vmatprep.subr.bf16.mxu0 0
        %787 = vmatpush1.bf16.msra.mxu0 0
        %788 = vmatprep.subr.bf16.mxu0 0
        %789 = vmatpush1.bf16.msra.mxu0 0
        %790 = vmatprep.subr.bf16.mxu0 0
        %791 = vmatpush1.bf16.msra.mxu0 0
        %792 = vmatprep.subr.bf16.mxu0 0
        %793 = vmatpush1.bf16.msra.mxu0 0
        %794 = vmatprep.subr.bf16.mxu0 0
        %795 = vmatpush1.bf16.msra.mxu0 0
        %796 = vmatprep.subr.bf16.mxu0 0
        %797 = vmatpush1.bf16.msra.mxu0 0
        %798 = vmatprep.subr.bf16.mxu0 0
        %799 = vmatpush1.bf16.msra.mxu0 0
        %800 = vmatprep.mubr.bf16.mxu0 0
        %801 = vmatmul.mubr.bf16.gmra.mrb[0].mxu0 %v725
        %v802 = vpop.f32.mrb[0].mxu0
        %v803 = vadd.f32 %v721, %v802
        %v804 = vpop.f32.mrb[0].mxu0
        %v805 = vadd.f32 %v721, %v804
        %v806 = vpop.f32.mrb[0].mxu0
        %v807 = vpop.f32.mrb[0].mxu0
        %808 = vdwg.mxu0
        %809 = vmatprep.subr.bf16.mxu0 %v600
        %810 = vmatpush1.bf16.msra.mxu0 %v599
        %811 = vmatprep.subr.bf16.mxu0 %v602
        %812 = vmatpush1.bf16.msra.mxu0 %v601
        %813 = vmatprep.subr.bf16.mxu0 0
        %814 = vmatpush1.bf16.msra.mxu0 0
        %815 = vmatprep.subr.bf16.mxu0 0
        %816 = vmatpush1.bf16.msra.mxu0 0
        %817 = vmatprep.subr.bf16.mxu0 0
        %818 = vmatpush1.bf16.msra.mxu0 0
        %819 = vmatprep.subr.bf16.mxu0 0
        %820 = vmatpush1.bf16.msra.mxu0 0
        %821 = vmatprep.subr.bf16.mxu0 0
        %822 = vmatpush1.bf16.msra.mxu0 0
        %823 = vmatprep.subr.bf16.mxu0 0
        %824 = vmatpush1.bf16.msra.mxu0 0
        %825 = vmatprep.subr.bf16.mxu0 0
        %826 = vmatpush1.bf16.msra.mxu0 0
        %827 = vmatprep.subr.bf16.mxu0 0
        %828 = vmatpush1.bf16.msra.mxu0 0
        %829 = vmatprep.subr.bf16.mxu0 0
        %830 = vmatpush1.bf16.msra.mxu0 0
        %831 = vmatprep.subr.bf16.mxu0 0
        %832 = vmatpush1.bf16.msra.mxu0 0
        %833 = vmatprep.subr.bf16.mxu0 0
        %834 = vmatpush1.bf16.msra.mxu0 0
        %835 = vmatprep.subr.bf16.mxu0 0
        %836 = vmatpush1.bf16.msra.mxu0 0
        %837 = vmatprep.subr.bf16.mxu0 0
        %838 = vmatpush1.bf16.msra.mxu0 0
        %839 = vmatprep.subr.bf16.mxu0 0
        %840 = vmatpush1.bf16.msra.mxu0 0
        %841 = vmatprep.mubr.bf16.mxu0 0
        %842 = vmatmul.mubr.bf16.gmra.mrb[0].mxu0 %v725
        %v843 = vpop.f32.mrb[0].mxu0
        %v844 = vadd.f32 %v721, %v843
        %v845 = vpop.f32.mrb[0].mxu0
        %v846 = vadd.f32 %v721, %v845
        %v847 = vpop.f32.mrb[0].mxu0
        %v848 = vpop.f32.mrb[0].mxu0
        %849 = vdwg.mxu0
        %850 = vmatprep.subr.bf16.mxu0 %v620
        %851 = vmatpush1.bf16.msra.mxu0 %v619
        %852 = vmatprep.subr.bf16.mxu0 %v622
        %853 = vmatpush1.bf16.msra.mxu0 %v621
        %854 = vmatprep.subr.bf16.mxu0 0
        %855 = vmatpush1.bf16.msra.mxu0 0
        %856 = vmatprep.subr.bf16.mxu0 0
        %857 = vmatpush1.bf16.msra.mxu0 0
        %858 = vmatprep.subr.bf16.mxu0 0
        %859 = vmatpush1.bf16.msra.mxu0 0
        %860 = vmatprep.subr.bf16.mxu0 0
        %861 = vmatpush1.bf16.msra.mxu0 0
        %862 = vmatprep.subr.bf16.mxu0 0
        %863 = vmatpush1.bf16.msra.mxu0 0
        %864 = vmatprep.subr.bf16.mxu0 0
        %865 = vmatpush1.bf16.msra.mxu0 0
        %866 = vmatprep.subr.bf16.mxu0 0
        %867 = vmatpush1.bf16.msra.mxu0 0
        %868 = vmatprep.subr.bf16.mxu0 0
        %869 = vmatpush1.bf16.msra.mxu0 0
        %870 = vmatprep.subr.bf16.mxu0 0
        %871 = vmatpush1.bf16.msra.mxu0 0
        %872 = vmatprep.subr.bf16.mxu0 0
        %873 = vmatpush1.bf16.msra.mxu0 0
        %874 = vmatprep.subr.bf16.mxu0 0
        %875 = vmatpush1.bf16.msra.mxu0 0
        %876 = vmatprep.subr.bf16.mxu0 0
        %877 = vmatpush1.bf16.msra.mxu0 0
        %878 = vmatprep.subr.bf16.mxu0 0
        %879 = vmatpush1.bf16.msra.mxu0 0
        %880 = vmatprep.subr.bf16.mxu0 0
        %881 = vmatpush1.bf16.msra.mxu0 0
        %882 = vmatprep.mubr.bf16.mxu0 0
        %883 = vmatmul.mubr.bf16.gmra.mrb[0].mxu0 %v725
        %v884 = vpop.f32.mrb[0].mxu0
        %v885 = vadd.f32 %v721, %v884
        %v886 = vpop.f32.mrb[0].mxu0
        %v887 = vadd.f32 %v721, %v886
        %v888 = vpop.f32.mrb[0].mxu0
        %v889 = vpop.f32.mrb[0].mxu0
        %890 = vdwg.mxu0
        %v891 = vmax.f32 %v762, 0.0
        %v892 = vmax.f32 %v764, 0.0
        %v893 = vmax.f32 %v803, 0.0
        %v894 = vmax.f32 %v805, 0.0
        %v895 = vmax.f32 %v844, 0.0
        %v896 = vmax.f32 %v846, 0.0
        %v897 = vmax.f32 %v885, 0.0
        %v898 = vmax.f32 %v887, 0.0
        %v899 = vld [vmem:[%s6] sm:$0xf]
        %v900 = vld [vmem:[%s6 + $0x4] sm:$0xf]
        %v901 = vld [vmem:[%s6 + $0x8] sm:$0xf]
        %v902 = vld [vmem:[%s6 + $0xc] sm:$0xf]
        %v903 = vpack.c.bf16 %v891, %v891
        %v904 = vpack.c.bf16 %v892, %v892
        %v905 = vpack.c.bf16 %v893, %v893
        %v906 = vpack.c.bf16 %v894, %v894
        %v907 = vpack.c.bf16 %v895, %v895
        %v908 = vpack.c.bf16 %v896, %v896
        %v909 = vpack.c.bf16 %v897, %v897
        %v910 = vpack.c.bf16 %v898, %v898
        %v911 = vld [vmem:[%s7] sm:$0xff]
        %v912 = vld [vmem:[%s7 + $0x8] sm:$0xff]
        %v913 = vld [vmem:[%s7 + $0x10] sm:$0xff]
        %v914 = vld [vmem:[%s7 + $0x18] sm:$0xff]
        %916 = vset.pattern.permute.xlu0 0
        %917 = vperm.xlu0 %916, %v911
        %v918 = vpop.permute.xlu0 %917
        %921 = vset.pattern.permute.xlu0 0
        %922 = vperm.xlu0 %921, %v912
        %v923 = vpop.permute.xlu0 %922
        %926 = vset.pattern.permute.xlu0 0
        %927 = vperm.xlu0 %926, %v913
        %v928 = vpop.permute.xlu0 %927
        %931 = vset.pattern.permute.xlu0 0
        %932 = vperm.xlu0 %931, %v914
        %v933 = vpop.permute.xlu0 %932
        %v939 = vunpack.c.l.b16 %v899
        %v940 = vunpack.c.l.b16 %v900
        %v941 = vunpack.c.l.b16 %v901
        %v942 = vunpack.c.l.b16 %v902
        %v943 = vpack.c.b16 %v940, %v939
        %v944 = vpack.c.b16 %v942, %v941
        %vm945 = vcmask 64512
        %v947 = vsel %vm945, %v943, 0
        %v950 = vsel %vm945, %v944, 0
        %vm952 = vcmask 1043456
        %v954 = vsel %vm952, %v903, 0
        %v957 = vsel %vm952, %v904, 0
        %v960 = vsel %vm952, %v905, 0
        %v963 = vsel %vm952, %v906, 0
        %v966 = vsel %vm952, %v907, 0
        %v969 = vsel %vm952, %v908, 0
        %v972 = vsel %vm952, %v909, 0
        %v975 = vsel %vm952, %v910, 0
        %977 = vmatprep.subr.bf16.mxu0 %v957
        %978 = vmatpush1.bf16.msra.mxu0 %v954
        %979 = vmatprep.subr.bf16.mxu0 0
        %980 = vmatpush1.bf16.msra.mxu0 0
        %981 = vmatprep.subr.bf16.mxu0 0
        %982 = vmatpush1.bf16.msra.mxu0 0
        %983 = vmatprep.subr.bf16.mxu0 0
        %984 = vmatpush1.bf16.msra.mxu0 0
        %985 = vmatprep.subr.bf16.mxu0 0
        %986 = vmatpush1.bf16.msra.mxu0 0
        %987 = vmatprep.subr.bf16.mxu0 0
        %988 = vmatpush1.bf16.msra.mxu0 0
        %989 = vmatprep.subr.bf16.mxu0 0
        %990 = vmatpush1.bf16.msra.mxu0 0
        %991 = vmatprep.subr.bf16.mxu0 0
        %992 = vmatpush1.bf16.msra.mxu0 0
        %993 = vmatprep.subr.bf16.mxu0 0
        %994 = vmatpush1.bf16.msra.mxu0 0
        %995 = vmatprep.subr.bf16.mxu0 0
        %996 = vmatpush1.bf16.msra.mxu0 0
        %997 = vmatprep.subr.bf16.mxu0 0
        %998 = vmatpush1.bf16.msra.mxu0 0
        %999 = vmatprep.subr.bf16.mxu0 0
        %1000 = vmatpush1.bf16.msra.mxu0 0
        %1001 = vmatprep.subr.bf16.mxu0 0
        %1002 = vmatpush1.bf16.msra.mxu0 0
        %1003 = vmatprep.subr.bf16.mxu0 0
        %1004 = vmatpush1.bf16.msra.mxu0 0
        %1005 = vmatprep.subr.bf16.mxu0 0
        %1006 = vmatpush1.bf16.msra.mxu0 0
        %1007 = vmatprep.subr.bf16.mxu0 0
        %1008 = vmatpush1.bf16.msra.mxu0 0
        %1009 = vmatprep.mubr.bf16.mxu0 0
        %1010 = vmatmul.mubr.bf16.gmra.mrb[0].mxu0 %v947
        %v1011 = vpop.f32.mrb[0].mxu0
        %v1012 = vadd.f32 %v918, %v1011
        %v1013 = vpop.f32.mrb[0].mxu0
        %v1014 = vadd.f32 %v918, %v1013
        %v1015 = vpop.f32.mrb[0].mxu0
        %v1016 = vadd.f32 %v923, %v1015
        %v1017 = vpop.f32.mrb[0].mxu0
        %v1018 = vadd.f32 %v923, %v1017
        %1019 = vmatprep.mubr.bf16.mxu0 0
        %1020 = vmatmul.mubr.bf16.gmra.mrb[0].mxu0 %v950
        %v1021 = vpop.f32.mrb[0].mxu0
        %v1022 = vadd.f32 %v928, %v1021
        %v1023 = vpop.f32.mrb[0].mxu0
        %v1024 = vadd.f32 %v928, %v1023
        %v1025 = vpop.f32.mrb[0].mxu0
        %v1026 = vadd.f32 %v933, %v1025
        %v1027 = vpop.f32.mrb[0].mxu0
        %v1028 = vadd.f32 %v933, %v1027
        %1029 = vdwg.mxu0
        %1030 = vmatprep.subr.bf16.mxu0 %v963
        %1031 = vmatpush1.bf16.msra.mxu0 %v960
        %1032 = vmatprep.subr.bf16.mxu0 0
        %1033 = vmatpush1.bf16.msra.mxu0 0
        %1034 = vmatprep.subr.bf16.mxu0 0
        %1035 = vmatpush1.bf16.msra.mxu0 0
        %1036 = vmatprep.subr.bf16.mxu0 0
        %1037 = vmatpush1.bf16.msra.mxu0 0
        %1038 = vmatprep.subr.bf16.mxu0 0
        %1039 = vmatpush1.bf16.msra.mxu0 0
        %1040 = vmatprep.subr.bf16.mxu0 0
        %1041 = vmatpush1.bf16.msra.mxu0 0
        %1042 = vmatprep.subr.bf16.mxu0 0
        %1043 = vmatpush1.bf16.msra.mxu0 0
        %1044 = vmatprep.subr.bf16.mxu0 0
        %1045 = vmatpush1.bf16.msra.mxu0 0
        %1046 = vmatprep.subr.bf16.mxu0 0
        %1047 = vmatpush1.bf16.msra.mxu0 0
        %1048 = vmatprep.subr.bf16.mxu0 0
        %1049 = vmatpush1.bf16.msra.mxu0 0
        %1050 = vmatprep.subr.bf16.mxu0 0
        %1051 = vmatpush1.bf16.msra.mxu0 0
        %1052 = vmatprep.subr.bf16.mxu0 0
        %1053 = vmatpush1.bf16.msra.mxu0 0
        %1054 = vmatprep.subr.bf16.mxu0 0
        %1055 = vmatpush1.bf16.msra.mxu0 0
        %1056 = vmatprep.subr.bf16.mxu0 0
        %1057 = vmatpush1.bf16.msra.mxu0 0
        %1058 = vmatprep.subr.bf16.mxu0 0
        %1059 = vmatpush1.bf16.msra.mxu0 0
        %1060 = vmatprep.subr.bf16.mxu0 0
        %1061 = vmatpush1.bf16.msra.mxu0 0
        %1062 = vmatprep.mubr.bf16.mxu0 0
        %1063 = vmatmul.mubr.bf16.gmra.mrb[0].mxu0 %v947
        %v1064 = vpop.f32.mrb[0].mxu0
        %v1065 = vadd.f32 %v918, %v1064
        %v1066 = vpop.f32.mrb[0].mxu0
        %v1067 = vadd.f32 %v918, %v1066
        %v1068 = vpop.f32.mrb[0].mxu0
        %v1069 = vadd.f32 %v923, %v1068
        %v1070 = vpop.f32.mrb[0].mxu0
        %v1071 = vadd.f32 %v923, %v1070
        %1072 = vmatprep.mubr.bf16.mxu0 0
        %1073 = vmatmul.mubr.bf16.gmra.mrb[0].mxu0 %v950
        %v1074 = vpop.f32.mrb[0].mxu0
        %v1075 = vadd.f32 %v928, %v1074
        %v1076 = vpop.f32.mrb[0].mxu0
        %v1077 = vadd.f32 %v928, %v1076
        %v1078 = vpop.f32.mrb[0].mxu0
        %v1079 = vadd.f32 %v933, %v1078
        %v1080 = vpop.f32.mrb[0].mxu0
        %v1081 = vadd.f32 %v933, %v1080
        %1082 = vdwg.mxu0
        %1083 = vmatprep.subr.bf16.mxu0 %v969
        %1084 = vmatpush1.bf16.msra.mxu0 %v966
        %1085 = vmatprep.subr.bf16.mxu0 0
        %1086 = vmatpush1.bf16.msra.mxu0 0
        %1087 = vmatprep.subr.bf16.mxu0 0
        %1088 = vmatpush1.bf16.msra.mxu0 0
        %1089 = vmatprep.subr.bf16.mxu0 0
        %1090 = vmatpush1.bf16.msra.mxu0 0
        %1091 = vmatprep.subr.bf16.mxu0 0
        %1092 = vmatpush1.bf16.msra.mxu0 0
        %1093 = vmatprep.subr.bf16.mxu0 0
        %1094 = vmatpush1.bf16.msra.mxu0 0
        %1095 = vmatprep.subr.bf16.mxu0 0
        %1096 = vmatpush1.bf16.msra.mxu0 0
        %1097 = vmatprep.subr.bf16.mxu0 0
        %1098 = vmatpush1.bf16.msra.mxu0 0
        %1099 = vmatprep.subr.bf16.mxu0 0
        %1100 = vmatpush1.bf16.msra.mxu0 0
        %1101 = vmatprep.subr.bf16.mxu0 0
        %1102 = vmatpush1.bf16.msra.mxu0 0
        %1103 = vmatprep.subr.bf16.mxu0 0
        %1104 = vmatpush1.bf16.msra.mxu0 0
        %1105 = vmatprep.subr.bf16.mxu0 0
        %1106 = vmatpush1.bf16.msra.mxu0 0
        %1107 = vmatprep.subr.bf16.mxu0 0
        %1108 = vmatpush1.bf16.msra.mxu0 0
        %1109 = vmatprep.subr.bf16.mxu0 0
        %1110 = vmatpush1.bf16.msra.mxu0 0
        %1111 = vmatprep.subr.bf16.mxu0 0
        %1112 = vmatpush1.bf16.msra.mxu0 0
        %1113 = vmatprep.subr.bf16.mxu0 0
        %1114 = vmatpush1.bf16.msra.mxu0 0
        %1115 = vmatprep.mubr.bf16.mxu0 0
        %1116 = vmatmul.mubr.bf16.gmra.mrb[0].mxu0 %v947
        %v1117 = vpop.f32.mrb[0].mxu0
        %v1118 = vadd.f32 %v918, %v1117
        %v1119 = vpop.f32.mrb[0].mxu0
        %v1120 = vadd.f32 %v918, %v1119
        %v1121 = vpop.f32.mrb[0].mxu0
        %v1122 = vadd.f32 %v923, %v1121
        %v1123 = vpop.f32.mrb[0].mxu0
        %v1124 = vadd.f32 %v923, %v1123
        %1125 = vmatprep.mubr.bf16.mxu0 0
        %1126 = vmatmul.mubr.bf16.gmra.mrb[0].mxu0 %v950
        %v1127 = vpop.f32.mrb[0].mxu0
        %v1128 = vadd.f32 %v928, %v1127
        %v1129 = vpop.f32.mrb[0].mxu0
        %v1130 = vadd.f32 %v928, %v1129
        %v1131 = vpop.f32.mrb[0].mxu0
        %v1132 = vadd.f32 %v933, %v1131
        %v1133 = vpop.f32.mrb[0].mxu0
        %v1134 = vadd.f32 %v933, %v1133
        %1135 = vdwg.mxu0
        %1136 = vmatprep.subr.bf16.mxu0 %v975
        %1137 = vmatpush1.bf16.msra.mxu0 %v972
        %1138 = vmatprep.subr.bf16.mxu0 0
        %1139 = vmatpush1.bf16.msra.mxu0 0
        %1140 = vmatprep.subr.bf16.mxu0 0
        %1141 = vmatpush1.bf16.msra.mxu0 0
        %1142 = vmatprep.subr.bf16.mxu0 0
        %1143 = vmatpush1.bf16.msra.mxu0 0
        %1144 = vmatprep.subr.bf16.mxu0 0
        %1145 = vmatpush1.bf16.msra.mxu0 0
        %1146 = vmatprep.subr.bf16.mxu0 0
        %1147 = vmatpush1.bf16.msra.mxu0 0
        %1148 = vmatprep.subr.bf16.mxu0 0
        %1149 = vmatpush1.bf16.msra.mxu0 0
        %1150 = vmatprep.subr.bf16.mxu0 0
        %1151 = vmatpush1.bf16.msra.mxu0 0
        %1152 = vmatprep.subr.bf16.mxu0 0
        %1153 = vmatpush1.bf16.msra.mxu0 0
        %1154 = vmatprep.subr.bf16.mxu0 0
        %1155 = vmatpush1.bf16.msra.mxu0 0
        %1156 = vmatprep.subr.bf16.mxu0 0
        %1157 = vmatpush1.bf16.msra.mxu0 0
        %1158 = vmatprep.subr.bf16.mxu0 0
        %1159 = vmatpush1.bf16.msra.mxu0 0
        %1160 = vmatprep.subr.bf16.mxu0 0
        %1161 = vmatpush1.bf16.msra.mxu0 0
        %1162 = vmatprep.subr.bf16.mxu0 0
        %1163 = vmatpush1.bf16.msra.mxu0 0
        %1164 = vmatprep.subr.bf16.mxu0 0
        %1165 = vmatpush1.bf16.msra.mxu0 0
        %1166 = vmatprep.subr.bf16.mxu0 0
        %1167 = vmatpush1.bf16.msra.mxu0 0
        %1168 = vmatprep.mubr.bf16.mxu0 0
        %1169 = vmatmul.mubr.bf16.gmra.mrb[0].mxu0 %v947
        %v1170 = vpop.f32.mrb[0].mxu0
        %v1171 = vadd.f32 %v918, %v1170
        %v1172 = vpop.f32.mrb[0].mxu0
        %v1173 = vadd.f32 %v918, %v1172
        %v1174 = vpop.f32.mrb[0].mxu0
        %v1175 = vadd.f32 %v923, %v1174
        %v1176 = vpop.f32.mrb[0].mxu0
        %v1177 = vadd.f32 %v923, %v1176
        %1178 = vmatprep.mubr.bf16.mxu0 0
        %1179 = vmatmul.mubr.bf16.gmra.mrb[0].mxu0 %v950
        %v1180 = vpop.f32.mrb[0].mxu0
        %v1181 = vadd.f32 %v928, %v1180
        %v1182 = vpop.f32.mrb[0].mxu0
        %v1183 = vadd.f32 %v928, %v1182
        %v1184 = vpop.f32.mrb[0].mxu0
        %v1185 = vadd.f32 %v933, %v1184
        %v1186 = vpop.f32.mrb[0].mxu0
        %v1187 = vadd.f32 %v933, %v1186
        %1188 = vdwg.mxu0
        %v1189 = vsub.f32 0.0, %v1012
        %v1190 = vsub.f32 0.0, %v1014
        %v1191 = vsub.f32 0.0, %v1065
        %v1192 = vsub.f32 0.0, %v1067
        %v1193 = vsub.f32 0.0, %v1118
        %v1194 = vsub.f32 0.0, %v1120
        %v1195 = vsub.f32 0.0, %v1171
        %v1196 = vsub.f32 0.0, %v1173
        %v1197 = vsub.f32 0.0, %v1016
        %v1198 = vsub.f32 0.0, %v1018
        %v1199 = vsub.f32 0.0, %v1069
        %v1200 = vsub.f32 0.0, %v1071
        %v1201 = vsub.f32 0.0, %v1122
        %v1202 = vsub.f32 0.0, %v1124
        %v1203 = vsub.f32 0.0, %v1175
        %v1204 = vsub.f32 0.0, %v1177
        %v1205 = vsub.f32 0.0, %v1022
        %v1206 = vsub.f32 0.0, %v1024
        %v1207 = vsub.f32 0.0, %v1075
        %v1208 = vsub.f32 0.0, %v1077
        %v1209 = vsub.f32 0.0, %v1128
        %v1210 = vsub.f32 0.0, %v1130
        %v1211 = vsub.f32 0.0, %v1181
        %v1212 = vsub.f32 0.0, %v1183
        %v1213 = vsub.f32 0.0, %v1026
        %v1214 = vsub.f32 0.0, %v1028
        %v1215 = vsub.f32 0.0, %v1079
        %v1216 = vsub.f32 0.0, %v1081
        %v1217 = vsub.f32 0.0, %v1132
        %v1218 = vsub.f32 0.0, %v1134
        %v1219 = vsub.f32 0.0, %v1185
        %v1220 = vsub.f32 0.0, %v1187
        %v1221 = vmul.f32 %v1189, 1.442695
        %v1222 = vpow.pop %v1221
        %v1223 = vmul.f32 %v1190, 1.442695
        %v1224 = vpow.pop %v1223
        %v1225 = vmul.f32 %v1191, 1.442695
        %v1226 = vpow.pop %v1225
        %v1227 = vmul.f32 %v1192, 1.442695
        %v1228 = vpow.pop %v1227
        %v1229 = vmul.f32 %v1193, 1.442695
        %v1230 = vpow.pop %v1229
        %v1231 = vmul.f32 %v1194, 1.442695
        %v1232 = vpow.pop %v1231
        %v1233 = vmul.f32 %v1195, 1.442695
        %v1234 = vpow.pop %v1233
        %v1235 = vmul.f32 %v1196, 1.442695
        %v1236 = vpow.pop %v1235
        %v1237 = vmul.f32 %v1197, 1.442695
        %v1238 = vpow.pop %v1237
        %v1239 = vmul.f32 %v1198, 1.442695
        %v1240 = vpow.pop %v1239
        %v1241 = vmul.f32 %v1199, 1.442695
        %v1242 = vpow.pop %v1241
        %v1243 = vmul.f32 %v1200, 1.442695
        %v1244 = vpow.pop %v1243
        %v1245 = vmul.f32 %v1201, 1.442695
        %v1246 = vpow.pop %v1245
        %v1247 = vmul.f32 %v1202, 1.442695
        %v1248 = vpow.pop %v1247
        %v1249 = vmul.f32 %v1203, 1.442695
        %v1250 = vpow.pop %v1249
        %v1251 = vmul.f32 %v1204, 1.442695
        %v1252 = vpow.pop %v1251
        %v1253 = vmul.f32 %v1205, 1.442695
        %v1254 = vpow.pop %v1253
        %v1255 = vmul.f32 %v1206, 1.442695
        %v1256 = vpow.pop %v1255
        %v1257 = vmul.f32 %v1207, 1.442695
        %v1258 = vpow.pop %v1257
        %v1259 = vmul.f32 %v1208, 1.442695
        %v1260 = vpow.pop %v1259
        %v1261 = vmul.f32 %v1209, 1.442695
        %v1262 = vpow.pop %v1261
        %v1263 = vmul.f32 %v1210, 1.442695
        %v1264 = vpow.pop %v1263
        %v1265 = vmul.f32 %v1211, 1.442695
        %v1266 = vpow.pop %v1265
        %v1267 = vmul.f32 %v1212, 1.442695
        %v1268 = vpow.pop %v1267
        %v1269 = vmul.f32 %v1213, 1.442695
        %v1270 = vpow.pop %v1269
        %v1271 = vmul.f32 %v1214, 1.442695
        %v1272 = vpow.pop %v1271
        %v1273 = vmul.f32 %v1215, 1.442695
        %v1274 = vpow.pop %v1273
        %v1275 = vmul.f32 %v1216, 1.442695
        %v1276 = vpow.pop %v1275
        %v1277 = vmul.f32 %v1217, 1.442695
        %v1278 = vpow.pop %v1277
        %v1279 = vmul.f32 %v1218, 1.442695
        %v1280 = vpow.pop %v1279
        %v1281 = vmul.f32 %v1219, 1.442695
        %v1282 = vpow.pop %v1281
        %v1283 = vmul.f32 %v1220, 1.442695
        %v1284 = vpow.pop %v1283
        %v1285 = vadd.f32 %v1222, 1.0
        %v1286 = vadd.f32 %v1224, 1.0
        %v1287 = vadd.f32 %v1226, 1.0
        %v1288 = vadd.f32 %v1228, 1.0
        %v1289 = vadd.f32 %v1230, 1.0
        %v1290 = vadd.f32 %v1232, 1.0
        %v1291 = vadd.f32 %v1234, 1.0
        %v1292 = vadd.f32 %v1236, 1.0
        %v1293 = vadd.f32 %v1238, 1.0
        %v1294 = vadd.f32 %v1240, 1.0
        %v1295 = vadd.f32 %v1242, 1.0
        %v1296 = vadd.f32 %v1244, 1.0
        %v1297 = vadd.f32 %v1246, 1.0
        %v1298 = vadd.f32 %v1248, 1.0
        %v1299 = vadd.f32 %v1250, 1.0
        %v1300 = vadd.f32 %v1252, 1.0
        %v1301 = vadd.f32 %v1254, 1.0
        %v1302 = vadd.f32 %v1256, 1.0
        %v1303 = vadd.f32 %v1258, 1.0
        %v1304 = vadd.f32 %v1260, 1.0
        %v1305 = vadd.f32 %v1262, 1.0
        %v1306 = vadd.f32 %v1264, 1.0
        %v1307 = vadd.f32 %v1266, 1.0
        %v1308 = vadd.f32 %v1268, 1.0
        %v1309 = vadd.f32 %v1270, 1.0
        %v1310 = vadd.f32 %v1272, 1.0
        %v1311 = vadd.f32 %v1274, 1.0
        %v1312 = vadd.f32 %v1276, 1.0
        %v1313 = vadd.f32 %v1278, 1.0
        %v1314 = vadd.f32 %v1280, 1.0
        %v1315 = vadd.f32 %v1282, 1.0
        %v1316 = vadd.f32 %v1284, 1.0
        %v1317 = vrcp.pop %v1285
        %v1318 = vrcp.pop %v1286
        %v1319 = vrcp.pop %v1287
        %v1320 = vrcp.pop %v1288
        %v1321 = vrcp.pop %v1289
        %v1322 = vrcp.pop %v1290
        %v1323 = vrcp.pop %v1291
        %v1324 = vrcp.pop %v1292
        %v1325 = vrcp.pop %v1293
        %v1326 = vrcp.pop %v1294
        %v1327 = vrcp.pop %v1295
        %v1328 = vrcp.pop %v1296
        %v1329 = vrcp.pop %v1297
        %v1330 = vrcp.pop %v1298
        %v1331 = vrcp.pop %v1299
        %v1332 = vrcp.pop %v1300
        %v1333 = vrcp.pop %v1301
        %v1334 = vrcp.pop %v1302
        %v1335 = vrcp.pop %v1303
        %v1336 = vrcp.pop %v1304
        %v1337 = vrcp.pop %v1305
        %v1338 = vrcp.pop %v1306
        %v1339 = vrcp.pop %v1307
        %v1340 = vrcp.pop %v1308
        %v1341 = vrcp.pop %v1309
        %v1342 = vrcp.pop %v1310
        %v1343 = vrcp.pop %v1311
        %v1344 = vrcp.pop %v1312
        %v1345 = vrcp.pop %v1313
        %v1346 = vrcp.pop %v1314
        %v1347 = vrcp.pop %v1315
        %v1348 = vrcp.pop %v1316
        %v1349 = vmul.f32 %v627, %v1317
        %v1350 = vmul.f32 %v628, %v1318
        %v1351 = vmul.f32 %v629, %v1319
        %v1352 = vmul.f32 %v630, %v1320
        %v1353 = vmul.f32 %v631, %v1321
        %v1354 = vmul.f32 %v632, %v1322
        %v1355 = vmul.f32 %v633, %v1323
        %v1356 = vmul.f32 %v634, %v1324
        %v1357 = vmul.f32 %v635, %v1325
        %v1358 = vmul.f32 %v636, %v1326
        %v1359 = vmul.f32 %v637, %v1327
        %v1360 = vmul.f32 %v638, %v1328
        %v1361 = vmul.f32 %v639, %v1329
        %v1362 = vmul.f32 %v640, %v1330
        %v1363 = vmul.f32 %v641, %v1331
        %v1364 = vmul.f32 %v642, %v1332
        %v1365 = vmul.f32 %v643, %v1333
        %v1366 = vmul.f32 %v644, %v1334
        %v1367 = vmul.f32 %v645, %v1335
        %v1368 = vmul.f32 %v646, %v1336
        %v1369 = vmul.f32 %v647, %v1337
        %v1370 = vmul.f32 %v648, %v1338
        %v1371 = vmul.f32 %v649, %v1339
        %v1372 = vmul.f32 %v650, %v1340
        %v1373 = vmul.f32 %v651, %v1341
        %v1374 = vmul.f32 %v652, %v1342
        %v1375 = vmul.f32 %v653, %v1343
        %v1376 = vmul.f32 %v654, %v1344
        %v1377 = vmul.f32 %v655, %v1345
        %v1378 = vmul.f32 %v656, %v1346
        %v1379 = vmul.f32 %v657, %v1347
        %v1380 = vmul.f32 %v658, %v1348
        %v1381 = vpack.c.bf16 %v1357, %v1349
        %v1382 = vpack.c.bf16 %v1358, %v1350
        %v1383 = vpack.c.bf16 %v1359, %v1351
        %v1384 = vpack.c.bf16 %v1360, %v1352
        %v1385 = vpack.c.bf16 %v1361, %v1353
        %v1386 = vpack.c.bf16 %v1362, %v1354
        %v1387 = vpack.c.bf16 %v1363, %v1355
        %v1388 = vpack.c.bf16 %v1364, %v1356
        %v1389 = vpack.c.bf16 %v1373, %v1365
        %v1390 = vpack.c.bf16 %v1374, %v1366
        %v1391 = vpack.c.bf16 %v1375, %v1367
        %v1392 = vpack.c.bf16 %v1376, %v1368
        %v1393 = vpack.c.bf16 %v1377, %v1369
        %v1394 = vpack.c.bf16 %v1378, %v1370
        %v1395 = vpack.c.bf16 %v1379, %v1371
        %v1396 = vpack.c.bf16 %v1380, %v1372
        %v1397 = vld [vmem:[%s8] sm:$0xf]
        %v1398 = vld [vmem:[%s8 + $0x4] sm:$0xf]
        %v1401 = vunpack.c.l.b16 %v1397
        %v1402 = vunpack.c.l.b16 %v1398
        %v1403 = vpack.c.b16 %v1402, %v1401
        %v1405 = vsel %vm723, %v1403, 0
        %1407 = vmatprep.subr.bf16.mxu0 %v1382
        %1408 = vmatpush1.bf16.msra.mxu0 %v1381
        %1409 = vmatprep.subr.bf16.mxu0 %v1390
        %1410 = vmatpush1.bf16.msra.mxu0 %v1389
        %1411 = vmatprep.subr.bf16.mxu0 0
        %1412 = vmatpush1.bf16.msra.mxu0 0
        %1413 = vmatprep.subr.bf16.mxu0 0
        %1414 = vmatpush1.bf16.msra.mxu0 0
        %1415 = vmatprep.subr.bf16.mxu0 0
        %1416 = vmatpush1.bf16.msra.mxu0 0
        %1417 = vmatprep.subr.bf16.mxu0 0
        %1418 = vmatpush1.bf16.msra.mxu0 0
        %1419 = vmatprep.subr.bf16.mxu0 0
        %1420 = vmatpush1.bf16.msra.mxu0 0
        %1421 = vmatprep.subr.bf16.mxu0 0
        %1422 = vmatpush1.bf16.msra.mxu0 0
        %1423 = vmatprep.subr.bf16.mxu0 0
        %1424 = vmatpush1.bf16.msra.mxu0 0
        %1425 = vmatprep.subr.bf16.mxu0 0
        %1426 = vmatpush1.bf16.msra.mxu0 0
        %1427 = vmatprep.subr.bf16.mxu0 0
        %1428 = vmatpush1.bf16.msra.mxu0 0
        %1429 = vmatprep.subr.bf16.mxu0 0
        %1430 = vmatpush1.bf16.msra.mxu0 0
        %1431 = vmatprep.subr.bf16.mxu0 0
        %1432 = vmatpush1.bf16.msra.mxu0 0
        %1433 = vmatprep.subr.bf16.mxu0 0
        %1434 = vmatpush1.bf16.msra.mxu0 0
        %1435 = vmatprep.subr.bf16.mxu0 0
        %1436 = vmatpush1.bf16.msra.mxu0 0
        %1437 = vmatprep.subr.bf16.mxu0 0
        %1438 = vmatpush1.bf16.msra.mxu0 0
        %1439 = vmatprep.mubr.bf16.mxu0 0
        %1440 = vmatmul.mubr.bf16.gmra.mrb[0].mxu0 %v1405
        %v1441 = vpop.f32.mrb[0].mxu0
        %v1442 = vadd.f32 0.0, %v1441
        %v1443 = vpop.f32.mrb[0].mxu0
        %v1444 = vadd.f32 0.0, %v1443
        %v1445 = vpop.f32.mrb[0].mxu0
        %v1446 = vadd.f32 0.0, %v1445
        %v1447 = vpop.f32.mrb[0].mxu0
        %v1448 = vadd.f32 0.0, %v1447
        %1449 = vdwg.mxu0
        %1450 = vmatprep.subr.bf16.mxu0 %v1384
        %1451 = vmatpush1.bf16.msra.mxu0 %v1383
        %1452 = vmatprep.subr.bf16.mxu0 %v1392
        %1453 = vmatpush1.bf16.msra.mxu0 %v1391
        %1454 = vmatprep.subr.bf16.mxu0 0
        %1455 = vmatpush1.bf16.msra.mxu0 0
        %1456 = vmatprep.subr.bf16.mxu0 0
        %1457 = vmatpush1.bf16.msra.mxu0 0
        %1458 = vmatprep.subr.bf16.mxu0 0
        %1459 = vmatpush1.bf16.msra.mxu0 0
        %1460 = vmatprep.subr.bf16.mxu0 0
        %1461 = vmatpush1.bf16.msra.mxu0 0
        %1462 = vmatprep.subr.bf16.mxu0 0
        %1463 = vmatpush1.bf16.msra.mxu0 0
        %1464 = vmatprep.subr.bf16.mxu0 0
        %1465 = vmatpush1.bf16.msra.mxu0 0
        %1466 = vmatprep.subr.bf16.mxu0 0
        %1467 = vmatpush1.bf16.msra.mxu0 0
        %1468 = vmatprep.subr.bf16.mxu0 0
        %1469 = vmatpush1.bf16.msra.mxu0 0
        %1470 = vmatprep.subr.bf16.mxu0 0
        %1471 = vmatpush1.bf16.msra.mxu0 0
        %1472 = vmatprep.subr.bf16.mxu0 0
        %1473 = vmatpush1.bf16.msra.mxu0 0
        %1474 = vmatprep.subr.bf16.mxu0 0
        %1475 = vmatpush1.bf16.msra.mxu0 0
        %1476 = vmatprep.subr.bf16.mxu0 0
        %1477 = vmatpush1.bf16.msra.mxu0 0
        %1478 = vmatprep.subr.bf16.mxu0 0
        %1479 = vmatpush1.bf16.msra.mxu0 0
        %1480 = vmatprep.subr.bf16.mxu0 0
        %1481 = vmatpush1.bf16.msra.mxu0 0
        %1482 = vmatprep.mubr.bf16.mxu0 0
        %1483 = vmatmul.mubr.bf16.gmra.mrb[0].mxu0 %v1405
        %v1484 = vpop.f32.mrb[0].mxu0
        %v1485 = vadd.f32 0.0, %v1484
        %v1486 = vpop.f32.mrb[0].mxu0
        %v1487 = vadd.f32 0.0, %v1486
        %v1488 = vpop.f32.mrb[0].mxu0
        %v1489 = vadd.f32 0.0, %v1488
        %v1490 = vpop.f32.mrb[0].mxu0
        %v1491 = vadd.f32 0.0, %v1490
        %1492 = vdwg.mxu0
        %1493 = vmatprep.subr.bf16.mxu0 %v1386
        %1494 = vmatpush1.bf16.msra.mxu0 %v1385
        %1495 = vmatprep.subr.bf16.mxu0 %v1394
        %1496 = vmatpush1.bf16.msra.mxu0 %v1393
        %1497 = vmatprep.subr.bf16.mxu0 0
        %1498 = vmatpush1.bf16.msra.mxu0 0
        %1499 = vmatprep.subr.bf16.mxu0 0
        %1500 = vmatpush1.bf16.msra.mxu0 0
        %1501 = vmatprep.subr.bf16.mxu0 0
        %1502 = vmatpush1.bf16.msra.mxu0 0
        %1503 = vmatprep.subr.bf16.mxu0 0
        %1504 = vmatpush1.bf16.msra.mxu0 0
        %1505 = vmatprep.subr.bf16.mxu0 0
        %1506 = vmatpush1.bf16.msra.mxu0 0
        %1507 = vmatprep.subr.bf16.mxu0 0
        %1508 = vmatpush1.bf16.msra.mxu0 0
        %1509 = vmatprep.subr.bf16.mxu0 0
        %1510 = vmatpush1.bf16.msra.mxu0 0
        %1511 = vmatprep.subr.bf16.mxu0 0
        %1512 = vmatpush1.bf16.msra.mxu0 0
        %1513 = vmatprep.subr.bf16.mxu0 0
        %1514 = vmatpush1.bf16.msra.mxu0 0
        %1515 = vmatprep.subr.bf16.mxu0 0
        %1516 = vmatpush1.bf16.msra.mxu0 0
        %1517 = vmatprep.subr.bf16.mxu0 0
        %1518 = vmatpush1.bf16.msra.mxu0 0
        %1519 = vmatprep.subr.bf16.mxu0 0
        %1520 = vmatpush1.bf16.msra.mxu0 0
        %1521 = vmatprep.subr.bf16.mxu0 0
        %1522 = vmatpush1.bf16.msra.mxu0 0
        %1523 = vmatprep.subr.bf16.mxu0 0
        %1524 = vmatpush1.bf16.msra.mxu0 0
        %1525 = vmatprep.mubr.bf16.mxu0 0
        %1526 = vmatmul.mubr.bf16.gmra.mrb[0].mxu0 %v1405
        %v1527 = vpop.f32.mrb[0].mxu0
        %v1528 = vadd.f32 0.0, %v1527
        %v1529 = vpop.f32.mrb[0].mxu0
        %v1530 = vadd.f32 0.0, %v1529
        %v1531 = vpop.f32.mrb[0].mxu0
        %v1532 = vadd.f32 0.0, %v1531
        %v1533 = vpop.f32.mrb[0].mxu0
        %v1534 = vadd.f32 0.0, %v1533
        %1535 = vdwg.mxu0
        %1536 = vmatprep.subr.bf16.mxu0 %v1388
        %1537 = vmatpush1.bf16.msra.mxu0 %v1387
        %1538 = vmatprep.subr.bf16.mxu0 %v1396
        %1539 = vmatpush1.bf16.msra.mxu0 %v1395
        %1540 = vmatprep.subr.bf16.mxu0 0
        %1541 = vmatpush1.bf16.msra.mxu0 0
        %1542 = vmatprep.subr.bf16.mxu0 0
        %1543 = vmatpush1.bf16.msra.mxu0 0
        %1544 = vmatprep.subr.bf16.mxu0 0
        %1545 = vmatpush1.bf16.msra.mxu0 0
        %1546 = vmatprep.subr.bf16.mxu0 0
        %1547 = vmatpush1.bf16.msra.mxu0 0
        %1548 = vmatprep.subr.bf16.mxu0 0
        %1549 = vmatpush1.bf16.msra.mxu0 0
        %1550 = vmatprep.subr.bf16.mxu0 0
        %1551 = vmatpush1.bf16.msra.mxu0 0
        %1552 = vmatprep.subr.bf16.mxu0 0
        %1553 = vmatpush1.bf16.msra.mxu0 0
        %1554 = vmatprep.subr.bf16.mxu0 0
        %1555 = vmatpush1.bf16.msra.mxu0 0
        %1556 = vmatprep.subr.bf16.mxu0 0
        %1557 = vmatpush1.bf16.msra.mxu0 0
        %1558 = vmatprep.subr.bf16.mxu0 0
        %1559 = vmatpush1.bf16.msra.mxu0 0
        %1560 = vmatprep.subr.bf16.mxu0 0
        %1561 = vmatpush1.bf16.msra.mxu0 0
        %1562 = vmatprep.subr.bf16.mxu0 0
        %1563 = vmatpush1.bf16.msra.mxu0 0
        %1564 = vmatprep.subr.bf16.mxu0 0
        %1565 = vmatpush1.bf16.msra.mxu0 0
        %1566 = vmatprep.subr.bf16.mxu0 0
        %1567 = vmatpush1.bf16.msra.mxu0 0
        %1568 = vmatprep.mubr.bf16.mxu0 0
        %1569 = vmatmul.mubr.bf16.gmra.mrb[0].mxu0 %v1405
        %v1570 = vpop.f32.mrb[0].mxu0
        %v1571 = vadd.f32 0.0, %v1570
        %v1572 = vpop.f32.mrb[0].mxu0
        %v1573 = vadd.f32 0.0, %v1572
        %v1574 = vpop.f32.mrb[0].mxu0
        %v1575 = vadd.f32 0.0, %v1574
        %v1576 = vpop.f32.mrb[0].mxu0
        %v1577 = vadd.f32 0.0, %v1576
        %1578 = vdwg.mxu0
        %s1579 = sld [smem:[#allocation2]]
        %v1580 = vstv %s1579
        %v1581 = vadd.f32 %v1442, %v1580
        %v1582 = vadd.f32 %v1444, %v1580
        %v1583 = vadd.f32 %v1485, %v1580
        %v1584 = vadd.f32 %v1487, %v1580
        %v1585 = vadd.f32 %v1528, %v1580
        %v1586 = vadd.f32 %v1530, %v1580
        %v1587 = vadd.f32 %v1571, %v1580
        %v1588 = vadd.f32 %v1573, %v1580
        %1589 = vrot.lane.b32.xlu0 %v1442, 17
        %v1590 = vpop.permute.xlu0 %1589
        %1591 = vrot.lane.b32.xlu0 %v1444, 17
        %v1592 = vpop.permute.xlu0 %1591
        %1593 = vrot.lane.b32.xlu0 %v1485, 17
        %v1594 = vpop.permute.xlu0 %1593
        %1595 = vrot.lane.b32.xlu0 %v1487, 17
        %v1596 = vpop.permute.xlu0 %1595
        %1597 = vrot.lane.b32.xlu0 %v1528, 17
        %v1598 = vpop.permute.xlu0 %1597
        %1599 = vrot.lane.b32.xlu0 %v1530, 17
        %v1600 = vpop.permute.xlu0 %1599
        %1601 = vrot.lane.b32.xlu0 %v1571, 17
        %v1602 = vpop.permute.xlu0 %1601
        %1603 = vrot.lane.b32.xlu0 %v1573, 17
        %v1604 = vpop.permute.xlu0 %1603
        %vm1605 = vcmp.lt.s32.totalorder %v660, 17
        %v1606 = vsel %vm1605, %v1602, %v1604
        %v1607 = vsel %vm1605, %v1600, %v1602
        %v1608 = vsel %vm1605, %v1598, %v1600
        %v1609 = vsel %vm1605, %v1596, %v1598
        %v1610 = vsel %vm1605, %v1594, %v1596
        %v1611 = vsel %vm1605, %v1592, %v1594
        %v1612 = vsel %vm1605, %v1590, %v1592
        %v1613 = vsel %vm1605, %v1604, %v1590
        %vm1614 = vmand %vm684, %vm700
        %vm1615 = vmand %vm685, %vm701
        %vm1616 = vmand %vm686, %vm702
        %vm1617 = vmand %vm687, %vm703
        %vm1618 = vmand %vm688, %vm704
        %vm1619 = vmand %vm689, %vm705
        %vm1620 = vmand %vm690, %vm706
        %vm1621 = vmand %vm691, %vm707
        %v1622 = vsel %vm1614, %v1613, 0.0
        %v1623 = vsel %vm1615, %v1612, 0.0
        %v1624 = vsel %vm1616, %v1611, 0.0
        %v1625 = vsel %vm1617, %v1610, 0.0
        %v1626 = vsel %vm1618, %v1609, 0.0
        %v1627 = vsel %vm1619, %v1608, 0.0
        %v1628 = vsel %vm1620, %v1607, 0.0
        %v1629 = vsel %vm1621, %v1606, 0.0
        %v1638 = vrot.slane %v1622, 4
        %v1639 = vrot.slane %v1623, 4
        %v1640 = vrot.slane %v1624, 4
        %v1641 = vrot.slane %v1625, 4
        %v1642 = vrot.slane %v1626, 4
        %v1643 = vrot.slane %v1627, 4
        %v1644 = vrot.slane %v1628, 4
        %v1645 = vrot.slane %v1629, 4
        %v1654 = vadd.f32 %v1581, %v1638
        %v1655 = vadd.f32 %v1582, %v1639
        %v1656 = vadd.f32 %v1583, %v1640
        %v1657 = vadd.f32 %v1584, %v1641
        %v1658 = vadd.f32 %v1585, %v1642
        %v1659 = vadd.f32 %v1586, %v1643
        %v1660 = vadd.f32 %v1587, %v1644
        %v1661 = vadd.f32 %v1588, %v1645
        %v1670 = vrot.slane %v1442, 1
        %v1671 = vrot.slane %v1444, 1
        %v1672 = vrot.slane %v1485, 1
        %v1673 = vrot.slane %v1487, 1
        %v1674 = vrot.slane %v1528, 1
        %v1675 = vrot.slane %v1530, 1
        %v1676 = vrot.slane %v1571, 1
        %v1677 = vrot.slane %v1573, 1
        %1686 = vrot.lane.b32.xlu0 %v1670, 16
        %v1687 = vpop.permute.xlu0 %1686
        %1688 = vrot.lane.b32.xlu0 %v1671, 16
        %v1689 = vpop.permute.xlu0 %1688
        %1690 = vrot.lane.b32.xlu0 %v1672, 16
        %v1691 = vpop.permute.xlu0 %1690
        %1692 = vrot.lane.b32.xlu0 %v1673, 16
        %v1693 = vpop.permute.xlu0 %1692
        %1694 = vrot.lane.b32.xlu0 %v1674, 16
        %v1695 = vpop.permute.xlu0 %1694
        %1696 = vrot.lane.b32.xlu0 %v1675, 16
        %v1697 = vpop.permute.xlu0 %1696
        %1698 = vrot.lane.b32.xlu0 %v1676, 16
        %v1699 = vpop.permute.xlu0 %1698
        %1700 = vrot.lane.b32.xlu0 %v1677, 16
        %v1701 = vpop.permute.xlu0 %1700
        %vm1702 = vcmp.lt.s32.totalorder %v660, 16
        %v1703 = vsel %vm1702, %v1699, %v1701
        %v1704 = vsel %vm1702, %v1697, %v1699
        %v1705 = vsel %vm1702, %v1695, %v1697
        %v1706 = vsel %vm1702, %v1693, %v1695
        %v1707 = vsel %vm1702, %v1691, %v1693
        %v1708 = vsel %vm1702, %v1689, %v1691
        %v1709 = vsel %vm1702, %v1687, %v1689
        %v1710 = vsel %vm1702, %v1701, %v1687
        %v1711 = vsel %vm684, %v1710, 0.0
        %v1712 = vsel %vm685, %v1709, 0.0
        %v1713 = vsel %vm686, %v1708, 0.0
        %v1714 = vsel %vm687, %v1707, 0.0
        %v1715 = vsel %vm688, %v1706, 0.0
        %v1716 = vsel %vm689, %v1705, 0.0
        %v1717 = vsel %vm690, %v1704, 0.0
        %v1718 = vsel %vm691, %v1703, 0.0
        %v1727 = vrot.slane %v1711, 4
        %v1728 = vrot.slane %v1712, 4
        %v1729 = vrot.slane %v1713, 4
        %v1730 = vrot.slane %v1714, 4
        %v1731 = vrot.slane %v1715, 4
        %v1732 = vrot.slane %v1716, 4
        %v1733 = vrot.slane %v1717, 4
        %v1734 = vrot.slane %v1718, 4
        %v1743 = vadd.f32 %v1654, %v1727
        %v1744 = vadd.f32 %v1655, %v1728
        %v1745 = vadd.f32 %v1656, %v1729
        %v1746 = vadd.f32 %v1657, %v1730
        %v1747 = vadd.f32 %v1658, %v1731
        %v1748 = vadd.f32 %v1659, %v1732
        %v1749 = vadd.f32 %v1660, %v1733
        %v1750 = vadd.f32 %v1661, %v1734
        %v1751 = vrot.slane %v1442, 2
        %v1752 = vrot.slane %v1444, 2
        %v1753 = vrot.slane %v1485, 2
        %v1754 = vrot.slane %v1487, 2
        %v1755 = vrot.slane %v1528, 2
        %v1756 = vrot.slane %v1530, 2
        %v1757 = vrot.slane %v1571, 2
        %v1758 = vrot.slane %v1573, 2
        %1767 = vrot.lane.b32.xlu0 %v1751, 15
        %v1768 = vpop.permute.xlu0 %1767
        %1769 = vrot.lane.b32.xlu0 %v1752, 15
        %v1770 = vpop.permute.xlu0 %1769
        %1771 = vrot.lane.b32.xlu0 %v1753, 15
        %v1772 = vpop.permute.xlu0 %1771
        %1773 = vrot.lane.b32.xlu0 %v1754, 15
        %v1774 = vpop.permute.xlu0 %1773
        %1775 = vrot.lane.b32.xlu0 %v1755, 15
        %v1776 = vpop.permute.xlu0 %1775
        %1777 = vrot.lane.b32.xlu0 %v1756, 15
        %v1778 = vpop.permute.xlu0 %1777
        %1779 = vrot.lane.b32.xlu0 %v1757, 15
        %v1780 = vpop.permute.xlu0 %1779
        %1781 = vrot.lane.b32.xlu0 %v1758, 15
        %v1782 = vpop.permute.xlu0 %1781
        %vm1783 = vcmp.lt.s32.totalorder %v660, 15
        %v1784 = vsel %vm1783, %v1780, %v1782
        %v1785 = vsel %vm1783, %v1778, %v1780
        %v1786 = vsel %vm1783, %v1776, %v1778
        %v1787 = vsel %vm1783, %v1774, %v1776
        %v1788 = vsel %vm1783, %v1772, %v1774
        %v1789 = vsel %vm1783, %v1770, %v1772
        %v1790 = vsel %vm1783, %v1768, %v1770
        %v1791 = vsel %vm1783, %v1782, %v1768
        %vm1792 = vmand %vm684, %vm708
        %vm1793 = vmand %vm685, %vm709
        %vm1794 = vmand %vm686, %vm710
        %vm1795 = vmand %vm687, %vm711
        %vm1796 = vmand %vm688, %vm712
        %vm1797 = vmand %vm689, %vm713
        %vm1798 = vmand %vm690, %vm714
        %vm1799 = vmand %vm691, %vm715
        %v1800 = vsel %vm1792, %v1791, 0.0
        %v1801 = vsel %vm1793, %v1790, 0.0
        %v1802 = vsel %vm1794, %v1789, 0.0
        %v1803 = vsel %vm1795, %v1788, 0.0
        %v1804 = vsel %vm1796, %v1787, 0.0
        %v1805 = vsel %vm1797, %v1786, 0.0
        %v1806 = vsel %vm1798, %v1785, 0.0
        %v1807 = vsel %vm1799, %v1784, 0.0
        %v1816 = vrot.slane %v1800, 4
        %v1817 = vrot.slane %v1801, 4
        %v1818 = vrot.slane %v1802, 4
        %v1819 = vrot.slane %v1803, 4
        %v1820 = vrot.slane %v1804, 4
        %v1821 = vrot.slane %v1805, 4
        %v1822 = vrot.slane %v1806, 4
        %v1823 = vrot.slane %v1807, 4
        %v1832 = vadd.f32 %v1743, %v1816
        %v1833 = vadd.f32 %v1744, %v1817
        %v1834 = vadd.f32 %v1745, %v1818
        %v1835 = vadd.f32 %v1746, %v1819
        %v1836 = vadd.f32 %v1747, %v1820
        %v1837 = vadd.f32 %v1748, %v1821
        %v1838 = vadd.f32 %v1749, %v1822
        %v1839 = vadd.f32 %v1750, %v1823
        %v1840 = vrot.slane %v1442, 3
        %v1841 = vrot.slane %v1444, 3
        %v1842 = vrot.slane %v1485, 3
        %v1843 = vrot.slane %v1487, 3
        %v1844 = vrot.slane %v1528, 3
        %v1845 = vrot.slane %v1530, 3
        %v1846 = vrot.slane %v1571, 3
        %v1847 = vrot.slane %v1573, 3
        %1856 = vrot.lane.b32.xlu0 %v1840, 1
        %v1857 = vpop.permute.xlu0 %1856
        %1858 = vrot.lane.b32.xlu0 %v1841, 1
        %v1859 = vpop.permute.xlu0 %1858
        %1860 = vrot.lane.b32.xlu0 %v1842, 1
        %v1861 = vpop.permute.xlu0 %1860
        %1862 = vrot.lane.b32.xlu0 %v1843, 1
        %v1863 = vpop.permute.xlu0 %1862
        %1864 = vrot.lane.b32.xlu0 %v1844, 1
        %v1865 = vpop.permute.xlu0 %1864
        %1866 = vrot.lane.b32.xlu0 %v1845, 1
        %v1867 = vpop.permute.xlu0 %1866
        %1868 = vrot.lane.b32.xlu0 %v1846, 1
        %v1869 = vpop.permute.xlu0 %1868
        %1870 = vrot.lane.b32.xlu0 %v1847, 1
        %v1871 = vpop.permute.xlu0 %1870
        %vm1872 = vcmp.lt.s32.totalorder %v660, 1
        %v1873 = vsel %vm1872, %v1869, %v1871
        %v1874 = vsel %vm1872, %v1867, %v1869
        %v1875 = vsel %vm1872, %v1865, %v1867
        %v1876 = vsel %vm1872, %v1863, %v1865
        %v1877 = vsel %vm1872, %v1861, %v1863
        %v1878 = vsel %vm1872, %v1859, %v1861
        %v1879 = vsel %vm1872, %v1857, %v1859
        %v1880 = vsel %vm1872, %v1871, %v1857
        %v1881 = vsel %vm700, %v1880, 0.0
        %v1882 = vsel %vm701, %v1879, 0.0
        %v1883 = vsel %vm702, %v1878, 0.0
        %v1884 = vsel %vm703, %v1877, 0.0
        %v1885 = vsel %vm704, %v1876, 0.0
        %v1886 = vsel %vm705, %v1875, 0.0
        %v1887 = vsel %vm706, %v1874, 0.0
        %v1888 = vsel %vm707, %v1873, 0.0
        %v1897 = vrot.slane %v1881, 4
        %v1898 = vrot.slane %v1882, 4
        %v1899 = vrot.slane %v1883, 4
        %v1900 = vrot.slane %v1884, 4
        %v1901 = vrot.slane %v1885, 4
        %v1902 = vrot.slane %v1886, 4
        %v1903 = vrot.slane %v1887, 4
        %v1904 = vrot.slane %v1888, 4
        %v1913 = vadd.f32 %v1832, %v1897
        %v1914 = vadd.f32 %v1833, %v1898
        %v1915 = vadd.f32 %v1834, %v1899
        %v1916 = vadd.f32 %v1835, %v1900
        %v1917 = vadd.f32 %v1836, %v1901
        %v1918 = vadd.f32 %v1837, %v1902
        %v1919 = vadd.f32 %v1838, %v1903
        %v1920 = vadd.f32 %v1839, %v1904
        %v1921 = vrot.slane %v1442, 5
        %v1922 = vrot.slane %v1444, 5
        %v1923 = vrot.slane %v1485, 5
        %v1924 = vrot.slane %v1487, 5
        %v1925 = vrot.slane %v1528, 5
        %v1926 = vrot.slane %v1530, 5
        %v1927 = vrot.slane %v1571, 5
        %v1928 = vrot.slane %v1573, 5
        %1937 = vrot.lane.b32.xlu0 %v1921, 127
        %v1938 = vpop.permute.xlu0 %1937
        %1939 = vrot.lane.b32.xlu0 %v1922, 127
        %v1940 = vpop.permute.xlu0 %1939
        %1941 = vrot.lane.b32.xlu0 %v1923, 127
        %v1942 = vpop.permute.xlu0 %1941
        %1943 = vrot.lane.b32.xlu0 %v1924, 127
        %v1944 = vpop.permute.xlu0 %1943
        %1945 = vrot.lane.b32.xlu0 %v1925, 127
        %v1946 = vpop.permute.xlu0 %1945
        %1947 = vrot.lane.b32.xlu0 %v1926, 127
        %v1948 = vpop.permute.xlu0 %1947
        %1949 = vrot.lane.b32.xlu0 %v1927, 127
        %v1950 = vpop.permute.xlu0 %1949
        %1951 = vrot.lane.b32.xlu0 %v1928, 127
        %v1952 = vpop.permute.xlu0 %1951
        %vm1953 = vcmp.lt.s32.totalorder %v660, 127
        %v1954 = vsel %vm1953, %v1950, %v1952
        %v1955 = vsel %vm1953, %v1948, %v1950
        %v1956 = vsel %vm1953, %v1946, %v1948
        %v1957 = vsel %vm1953, %v1944, %v1946
        %v1958 = vsel %vm1953, %v1942, %v1944
        %v1959 = vsel %vm1953, %v1940, %v1942
        %v1960 = vsel %vm1953, %v1938, %v1940
        %v1961 = vsel %vm1953, %v1952, %v1938
        %v1962 = vsel %vm708, %v1960, 0.0
        %v1963 = vsel %vm709, %v1959, 0.0
        %v1964 = vsel %vm710, %v1958, 0.0
        %v1965 = vsel %vm711, %v1957, 0.0
        %v1966 = vsel %vm712, %v1956, 0.0
        %v1967 = vsel %vm713, %v1955, 0.0
        %v1968 = vsel %vm714, %v1954, 0.0
        %v1969 = vsel %vm715, %v1961, 0.0
        %v1978 = vrot.slane %v1962, 4
        %v1979 = vrot.slane %v1963, 4
        %v1980 = vrot.slane %v1964, 4
        %v1981 = vrot.slane %v1965, 4
        %v1982 = vrot.slane %v1966, 4
        %v1983 = vrot.slane %v1967, 4
        %v1984 = vrot.slane %v1968, 4
        %v1985 = vrot.slane %v1969, 4
        %v1994 = vadd.f32 %v1913, %v1978
        %v1995 = vadd.f32 %v1914, %v1979
        %v1996 = vadd.f32 %v1915, %v1980
        %v1997 = vadd.f32 %v1916, %v1981
        %v1998 = vadd.f32 %v1917, %v1982
        %v1999 = vadd.f32 %v1918, %v1983
        %v2000 = vadd.f32 %v1919, %v1984
        %v2001 = vadd.f32 %v1920, %v1985
        %v2002 = vrot.slane %v1442, 6
        %v2003 = vrot.slane %v1444, 6
        %v2004 = vrot.slane %v1485, 6
        %v2005 = vrot.slane %v1487, 6
        %v2006 = vrot.slane %v1528, 6
        %v2007 = vrot.slane %v1530, 6
        %v2008 = vrot.slane %v1571, 6
        %v2009 = vrot.slane %v1573, 6
        %2018 = vrot.lane.b32.xlu0 %v2002, 113
        %v2019 = vpop.permute.xlu0 %2018
        %2020 = vrot.lane.b32.xlu0 %v2003, 113
        %v2021 = vpop.permute.xlu0 %2020
        %2022 = vrot.lane.b32.xlu0 %v2004, 113
        %v2023 = vpop.permute.xlu0 %2022
        %2024 = vrot.lane.b32.xlu0 %v2005, 113
        %v2025 = vpop.permute.xlu0 %2024
        %2026 = vrot.lane.b32.xlu0 %v2006, 113
        %v2027 = vpop.permute.xlu0 %2026
        %2028 = vrot.lane.b32.xlu0 %v2007, 113
        %v2029 = vpop.permute.xlu0 %2028
        %2030 = vrot.lane.b32.xlu0 %v2008, 113
        %v2031 = vpop.permute.xlu0 %2030
        %2032 = vrot.lane.b32.xlu0 %v2009, 113
        %v2033 = vpop.permute.xlu0 %2032
        %vm2034 = vcmp.lt.s32.totalorder %v660, 113
        %v2035 = vsel %vm2034, %v2031, %v2033
        %v2036 = vsel %vm2034, %v2029, %v2031
        %v2037 = vsel %vm2034, %v2027, %v2029
        %v2038 = vsel %vm2034, %v2025, %v2027
        %v2039 = vsel %vm2034, %v2023, %v2025
        %v2040 = vsel %vm2034, %v2021, %v2023
        %v2041 = vsel %vm2034, %v2019, %v2021
        %v2042 = vsel %vm2034, %v2033, %v2019
        %vm2043 = vmand %vm692, %vm700
        %vm2044 = vmand %vm693, %vm701
        %vm2045 = vmand %vm694, %vm702
        %vm2046 = vmand %vm695, %vm703
        %vm2047 = vmand %vm696, %vm704
        %vm2048 = vmand %vm697, %vm705
        %vm2049 = vmand %vm698, %vm706
        %vm2050 = vmand %vm699, %vm707
        %v2051 = vsel %vm2043, %v2041, 0.0
        %v2052 = vsel %vm2044, %v2040, 0.0
        %v2053 = vsel %vm2045, %v2039, 0.0
        %v2054 = vsel %vm2046, %v2038, 0.0
        %v2055 = vsel %vm2047, %v2037, 0.0
        %v2056 = vsel %vm2048, %v2036, 0.0
        %v2057 = vsel %vm2049, %v2035, 0.0
        %v2058 = vsel %vm2050, %v2042, 0.0
        %v2067 = vrot.slane %v2051, 4
        %v2068 = vrot.slane %v2052, 4
        %v2069 = vrot.slane %v2053, 4
        %v2070 = vrot.slane %v2054, 4
        %v2071 = vrot.slane %v2055, 4
        %v2072 = vrot.slane %v2056, 4
        %v2073 = vrot.slane %v2057, 4
        %v2074 = vrot.slane %v2058, 4
        %v2083 = vadd.f32 %v1994, %v2067
        %v2084 = vadd.f32 %v1995, %v2068
        %v2085 = vadd.f32 %v1996, %v2069
        %v2086 = vadd.f32 %v1997, %v2070
        %v2087 = vadd.f32 %v1998, %v2071
        %v2088 = vadd.f32 %v1999, %v2072
        %v2089 = vadd.f32 %v2000, %v2073
        %v2090 = vadd.f32 %v2001, %v2074
        %v2091 = vrot.slane %v1442, 7
        %v2092 = vrot.slane %v1444, 7
        %v2093 = vrot.slane %v1485, 7
        %v2094 = vrot.slane %v1487, 7
        %v2095 = vrot.slane %v1528, 7
        %v2096 = vrot.slane %v1530, 7
        %v2097 = vrot.slane %v1571, 7
        %v2098 = vrot.slane %v1573, 7
        %2107 = vrot.lane.b32.xlu0 %v2091, 112
        %v2108 = vpop.permute.xlu0 %2107
        %2109 = vrot.lane.b32.xlu0 %v2092, 112
        %v2110 = vpop.permute.xlu0 %2109
        %2111 = vrot.lane.b32.xlu0 %v2093, 112
        %v2112 = vpop.permute.xlu0 %2111
        %2113 = vrot.lane.b32.xlu0 %v2094, 112
        %v2114 = vpop.permute.xlu0 %2113
        %2115 = vrot.lane.b32.xlu0 %v2095, 112
        %v2116 = vpop.permute.xlu0 %2115
        %2117 = vrot.lane.b32.xlu0 %v2096, 112
        %v2118 = vpop.permute.xlu0 %2117
        %2119 = vrot.lane.b32.xlu0 %v2097, 112
        %v2120 = vpop.permute.xlu0 %2119
        %2121 = vrot.lane.b32.xlu0 %v2098, 112
        %v2122 = vpop.permute.xlu0 %2121
        %vm2123 = vcmp.lt.s32.totalorder %v660, 112
        %v2124 = vsel %vm2123, %v2120, %v2122
        %v2125 = vsel %vm2123, %v2118, %v2120
        %v2126 = vsel %vm2123, %v2116, %v2118
        %v2127 = vsel %vm2123, %v2114, %v2116
        %v2128 = vsel %vm2123, %v2112, %v2114
        %v2129 = vsel %vm2123, %v2110, %v2112
        %v2130 = vsel %vm2123, %v2108, %v2110
        %v2131 = vsel %vm2123, %v2122, %v2108
        %v2132 = vsel %vm692, %v2130, 0.0
        %v2133 = vsel %vm693, %v2129, 0.0
        %v2134 = vsel %vm694, %v2128, 0.0
        %v2135 = vsel %vm695, %v2127, 0.0
        %v2136 = vsel %vm696, %v2126, 0.0
        %v2137 = vsel %vm697, %v2125, 0.0
        %v2138 = vsel %vm698, %v2124, 0.0
        %v2139 = vsel %vm699, %v2131, 0.0
        %v2148 = vrot.slane %v2132, 4
        %v2149 = vrot.slane %v2133, 4
        %v2150 = vrot.slane %v2134, 4
        %v2151 = vrot.slane %v2135, 4
        %v2152 = vrot.slane %v2136, 4
        %v2153 = vrot.slane %v2137, 4
        %v2154 = vrot.slane %v2138, 4
        %v2155 = vrot.slane %v2139, 4
        %v2164 = vadd.f32 %v2083, %v2148
        %v2165 = vadd.f32 %v2084, %v2149
        %v2166 = vadd.f32 %v2085, %v2150
        %v2167 = vadd.f32 %v2086, %v2151
        %v2168 = vadd.f32 %v2087, %v2152
        %v2169 = vadd.f32 %v2088, %v2153
        %v2170 = vadd.f32 %v2089, %v2154
        %v2171 = vadd.f32 %v2090, %v2155
        %2172 = vrot.lane.b32.xlu0 %v1446, 111
        %v2173 = vpop.permute.xlu0 %2172
        %2174 = vrot.lane.b32.xlu0 %v1448, 111
        %v2175 = vpop.permute.xlu0 %2174
        %2176 = vrot.lane.b32.xlu0 %v1489, 111
        %v2177 = vpop.permute.xlu0 %2176
        %2178 = vrot.lane.b32.xlu0 %v1491, 111
        %v2179 = vpop.permute.xlu0 %2178
        %2180 = vrot.lane.b32.xlu0 %v1532, 111
        %v2181 = vpop.permute.xlu0 %2180
        %2182 = vrot.lane.b32.xlu0 %v1534, 111
        %v2183 = vpop.permute.xlu0 %2182
        %2184 = vrot.lane.b32.xlu0 %v1575, 111
        %v2185 = vpop.permute.xlu0 %2184
        %2186 = vrot.lane.b32.xlu0 %v1577, 111
        %v2187 = vpop.permute.xlu0 %2186
        %vm2188 = vcmp.lt.s32.totalorder %v660, 111
        %v2189 = vsel %vm2188, %v2185, %v2187
        %v2190 = vsel %vm2188, %v2183, %v2185
        %v2191 = vsel %vm2188, %v2181, %v2183
        %v2192 = vsel %vm2188, %v2179, %v2181
        %v2193 = vsel %vm2188, %v2177, %v2179
        %v2194 = vsel %vm2188, %v2175, %v2177
        %v2195 = vsel %vm2188, %v2173, %v2175
        %v2196 = vsel %vm2188, %v2187, %v2173
        %vm2197 = vmand %vm692, %vm708
        %vm2198 = vmand %vm693, %vm709
        %vm2199 = vmand %vm694, %vm710
        %vm2200 = vmand %vm695, %vm711
        %vm2201 = vmand %vm696, %vm712
        %vm2202 = vmand %vm697, %vm713
        %vm2203 = vmand %vm698, %vm714
        %vm2204 = vmand %vm699, %vm715
        %v2205 = vsel %vm2197, %v2195, 0.0
        %v2206 = vsel %vm2198, %v2194, 0.0
        %v2207 = vsel %vm2199, %v2193, 0.0
        %v2208 = vsel %vm2200, %v2192, 0.0
        %v2209 = vsel %vm2201, %v2191, 0.0
        %v2210 = vsel %vm2202, %v2190, 0.0
        %v2211 = vsel %vm2203, %v2189, 0.0
        %v2212 = vsel %vm2204, %v2196, 0.0
        %v2221 = vrot.slane %v2205, 4
        %v2222 = vrot.slane %v2206, 4
        %v2223 = vrot.slane %v2207, 4
        %v2224 = vrot.slane %v2208, 4
        %v2225 = vrot.slane %v2209, 4
        %v2226 = vrot.slane %v2210, 4
        %v2227 = vrot.slane %v2211, 4
        %v2228 = vrot.slane %v2212, 4
        %v2237 = vadd.f32 %v2164, %v2221
        %v2238 = vadd.f32 %v2165, %v2222
        %v2239 = vadd.f32 %v2166, %v2223
        %v2240 = vadd.f32 %v2167, %v2224
        %v2241 = vadd.f32 %v2168, %v2225
        %v2242 = vadd.f32 %v2169, %v2226
        %v2243 = vadd.f32 %v2170, %v2227
        %v2244 = vadd.f32 %v2171, %v2228
        %v2245 = vsub.f32 0.0, %v2237
        %v2246 = vsub.f32 0.0, %v2238
        %v2247 = vsub.f32 0.0, %v2239
        %v2248 = vsub.f32 0.0, %v2240
        %v2249 = vsub.f32 0.0, %v2241
        %v2250 = vsub.f32 0.0, %v2242
        %v2251 = vsub.f32 0.0, %v2243
        %v2252 = vsub.f32 0.0, %v2244
        %v2253 = vmul.f32 %v2245, 1.442695
        %v2254 = vpow.pop %v2253
        %v2255 = vmul.f32 %v2246, 1.442695
        %v2256 = vpow.pop %v2255
        %v2257 = vmul.f32 %v2247, 1.442695
        %v2258 = vpow.pop %v2257
        %v2259 = vmul.f32 %v2248, 1.442695
        %v2260 = vpow.pop %v2259
        %v2261 = vmul.f32 %v2249, 1.442695
        %v2262 = vpow.pop %v2261
        %v2263 = vmul.f32 %v2250, 1.442695
        %v2264 = vpow.pop %v2263
        %v2265 = vmul.f32 %v2251, 1.442695
        %v2266 = vpow.pop %v2265
        %v2267 = vmul.f32 %v2252, 1.442695
        %v2268 = vpow.pop %v2267
        %v2269 = vadd.f32 %v2254, 1.0
        %v2270 = vadd.f32 %v2256, 1.0
        %v2271 = vadd.f32 %v2258, 1.0
        %v2272 = vadd.f32 %v2260, 1.0
        %v2273 = vadd.f32 %v2262, 1.0
        %v2274 = vadd.f32 %v2264, 1.0
        %v2275 = vadd.f32 %v2266, 1.0
        %v2276 = vadd.f32 %v2268, 1.0
        %v2277 = vrcp.pop %v2269
        %v2278 = vrcp.pop %v2270
        %v2279 = vrcp.pop %v2271
        %v2280 = vrcp.pop %v2272
        %v2281 = vrcp.pop %v2273
        %v2282 = vrcp.pop %v2274
        %v2283 = vrcp.pop %v2275
        %v2284 = vrcp.pop %v2276
        %v2285 = vlaneseq
        %v2286 = vshrl.u32 %v2285, 7
        %v2287 = vsub.s32 4, %v2286
        %v2288 = vrot.slane %v2277, %v2287
        %v2289 = vlaneseq
        %v2290 = vshrl.u32 %v2289, 7
        %v2291 = vsub.s32 4, %v2290
        %v2292 = vrot.slane %v2278, %v2291
        %v2293 = vlaneseq
        %v2294 = vshrl.u32 %v2293, 7
        %v2295 = vsub.s32 4, %v2294
        %v2296 = vrot.slane %v2279, %v2295
        %v2297 = vlaneseq
        %v2298 = vshrl.u32 %v2297, 7
        %v2299 = vsub.s32 4, %v2298
        %v2300 = vrot.slane %v2280, %v2299
        %v2301 = vlaneseq
        %v2302 = vshrl.u32 %v2301, 7
        %v2303 = vsub.s32 4, %v2302
        %v2304 = vrot.slane %v2281, %v2303
        %v2305 = vlaneseq
        %v2306 = vshrl.u32 %v2305, 7
        %v2307 = vsub.s32 4, %v2306
        %v2308 = vrot.slane %v2282, %v2307
        %v2309 = vlaneseq
        %v2310 = vshrl.u32 %v2309, 7
        %v2311 = vsub.s32 4, %v2310
        %v2312 = vrot.slane %v2283, %v2311
        %v2313 = vlaneseq
        %v2314 = vshrl.u32 %v2313, 7
        %v2315 = vsub.s32 4, %v2314
        %v2316 = vrot.slane %v2284, %v2315
        %v2317 = vmul.f32 %v1349, %v2288
        %v2318 = vmul.f32 %v1350, %v2292
        %v2319 = vmul.f32 %v1351, %v2296
        %v2320 = vmul.f32 %v1352, %v2300
        %v2321 = vmul.f32 %v1353, %v2304
        %v2322 = vmul.f32 %v1354, %v2308
        %v2323 = vmul.f32 %v1355, %v2312
        %v2324 = vmul.f32 %v1356, %v2316
        %v2325 = vmul.f32 %v1357, %v2288
        %v2326 = vmul.f32 %v1358, %v2292
        %v2327 = vmul.f32 %v1359, %v2296
        %v2328 = vmul.f32 %v1360, %v2300
        %v2329 = vmul.f32 %v1361, %v2304
        %v2330 = vmul.f32 %v1362, %v2308
        %v2331 = vmul.f32 %v1363, %v2312
        %v2332 = vmul.f32 %v1364, %v2316
        %v2333 = vmul.f32 %v1365, %v2288
        %v2334 = vmul.f32 %v1366, %v2292
        %v2335 = vmul.f32 %v1367, %v2296
        %v2336 = vmul.f32 %v1368, %v2300
        %v2337 = vmul.f32 %v1369, %v2304
        %v2338 = vmul.f32 %v1370, %v2308
        %v2339 = vmul.f32 %v1371, %v2312
        %v2340 = vmul.f32 %v1372, %v2316
        %v2341 = vmul.f32 %v1373, %v2288
        %v2342 = vmul.f32 %v1374, %v2292
        %v2343 = vmul.f32 %v1375, %v2296
        %v2344 = vmul.f32 %v1376, %v2300
        %v2345 = vmul.f32 %v1377, %v2304
        %v2346 = vmul.f32 %v1378, %v2308
        %v2347 = vmul.f32 %v1379, %v2312
        %v2348 = vmul.f32 %v1380, %v2316
        %v2349 = vpack.c.bf16 %v2325, %v2317
        %v2350 = vpack.c.bf16 %v2326, %v2318
        %v2351 = vpack.c.bf16 %v2327, %v2319
        %v2352 = vpack.c.bf16 %v2328, %v2320
        %v2353 = vpack.c.bf16 %v2329, %v2321
        %v2354 = vpack.c.bf16 %v2330, %v2322
        %v2355 = vpack.c.bf16 %v2331, %v2323
        %v2356 = vpack.c.bf16 %v2332, %v2324
        %v2357 = vpack.c.bf16 %v2341, %v2333
        %v2358 = vpack.c.bf16 %v2342, %v2334
        %v2359 = vpack.c.bf16 %v2343, %v2335
        %v2360 = vpack.c.bf16 %v2344, %v2336
        %v2361 = vpack.c.bf16 %v2345, %v2337
        %v2362 = vpack.c.bf16 %v2346, %v2338
        %v2363 = vpack.c.bf16 %v2347, %v2339
        %v2364 = vpack.c.bf16 %v2348, %v2340
        %v2365 = vld [vmem:[%s10] sm:$0xf]
        %v2366 = vld [vmem:[%s10 + $0x4] sm:$0xf]
        %v2367 = vld [vmem:[%s10 + $0x8] sm:$0xf]
        %v2368 = vld [vmem:[%s10 + $0xc] sm:$0xf]
        %v2369 = vld [vmem:[%s11] sm:$0xff]
        %v2370 = vld [vmem:[%s11 + $0x8] sm:$0xff]
        %v2371 = vld [vmem:[%s11 + $0x10] sm:$0xff]
        %v2372 = vld [vmem:[%s11 + $0x18] sm:$0xff]
        %2374 = vset.pattern.permute.xlu0 0
        %2375 = vperm.xlu0 %2374, %v2369
        %v2376 = vpop.permute.xlu0 %2375
        %2379 = vset.pattern.permute.xlu0 0
        %2380 = vperm.xlu0 %2379, %v2370
        %v2381 = vpop.permute.xlu0 %2380
        %2384 = vset.pattern.permute.xlu0 0
        %2385 = vperm.xlu0 %2384, %v2371
        %v2386 = vpop.permute.xlu0 %2385
        %2389 = vset.pattern.permute.xlu0 0
        %2390 = vperm.xlu0 %2389, %v2372
        %v2391 = vpop.permute.xlu0 %2390
        %v2397 = vunpack.c.l.b16 %v2365
        %v2398 = vunpack.c.l.b16 %v2366
        %v2399 = vunpack.c.l.b16 %v2367
        %v2400 = vunpack.c.l.b16 %v2368
        %v2401 = vpack.c.b16 %v2398, %v2397
        %v2402 = vpack.c.b16 %v2400, %v2399
        %2405 = vmatprep.subr.bf16.mxu0 %v2350
        %2406 = vmatpush1.bf16.msra.mxu0 %v2349
        %2407 = vmatprep.subr.bf16.mxu0 %v2358
        %2408 = vmatpush1.bf16.msra.mxu0 %v2357
        %2409 = vmatprep.subr.bf16.mxu0 %v2352
        %2410 = vmatpush1.bf16.msra.mxu0 %v2351
        %2411 = vmatprep.subr.bf16.mxu0 %v2360
        %2412 = vmatpush1.bf16.msra.mxu0 %v2359
        %2413 = vmatprep.subr.bf16.mxu0 %v2354
        %2414 = vmatpush1.bf16.msra.mxu0 %v2353
        %2415 = vmatprep.subr.bf16.mxu0 %v2362
        %2416 = vmatpush1.bf16.msra.mxu0 %v2361
        %2417 = vmatprep.subr.bf16.mxu0 %v2356
        %2418 = vmatpush1.bf16.msra.mxu0 %v2355
        %2419 = vmatprep.subr.bf16.mxu0 %v2364
        %2420 = vmatpush1.bf16.msra.mxu0 %v2363
        %2421 = vmatprep.subr.bf16.mxu0 0
        %2422 = vmatpush1.bf16.msra.mxu0 0
        %2423 = vmatprep.subr.bf16.mxu0 0
        %2424 = vmatpush1.bf16.msra.mxu0 0
        %2425 = vmatprep.subr.bf16.mxu0 0
        %2426 = vmatpush1.bf16.msra.mxu0 0
        %2427 = vmatprep.subr.bf16.mxu0 0
        %2428 = vmatpush1.bf16.msra.mxu0 0
        %2429 = vmatprep.subr.bf16.mxu0 0
        %2430 = vmatpush1.bf16.msra.mxu0 0
        %2431 = vmatprep.subr.bf16.mxu0 0
        %2432 = vmatpush1.bf16.msra.mxu0 0
        %2433 = vmatprep.subr.bf16.mxu0 0
        %2434 = vmatpush1.bf16.msra.mxu0 0
        %2435 = vmatprep.subr.bf16.mxu0 0
        %2436 = vmatpush1.bf16.msra.mxu0 0
        %2437 = vmatprep.mubr.bf16.mxu0 0
        %2438 = vmatmul.mubr.bf16.gmra.mrb[0].mxu0 %v2401
        %v2439 = vpop.f32.mrb[0].mxu0
        %v2440 = vadd.f32 %v2376, %v2439
        %v2441 = vpop.f32.mrb[0].mxu0
        %v2442 = vadd.f32 %v2376, %v2441
        %v2443 = vpop.f32.mrb[0].mxu0
        %v2444 = vadd.f32 %v2381, %v2443
        %v2445 = vpop.f32.mrb[0].mxu0
        %v2446 = vadd.f32 %v2381, %v2445
        %2447 = vmatprep.mubr.bf16.mxu0 0
        %2448 = vmatmul.mubr.bf16.gmra.mrb[0].mxu0 %v2402
        %v2449 = vpop.f32.mrb[0].mxu0
        %v2450 = vadd.f32 %v2386, %v2449
        %v2451 = vpop.f32.mrb[0].mxu0
        %v2452 = vadd.f32 %v2386, %v2451
        %v2453 = vpop.f32.mrb[0].mxu0
        %v2454 = vadd.f32 %v2391, %v2453
        %v2455 = vpop.f32.mrb[0].mxu0
        %v2456 = vadd.f32 %v2391, %v2455
        %2457 = vdwg.mxu0
        %v2458 = vpack.c.bf16 %v2444, %v2440
        %v2459 = vpack.c.bf16 %v2446, %v2442
        %v2460 = vpack.c.bf16 %v2454, %v2450
        %v2461 = vpack.c.bf16 %v2456, %v2452
        %v2466 = vunpack.c.l.b16 %v2458
        %v2467 = vunpack.c.l.b16 %v2459
        %v2468 = vunpack.c.h.b16 %v2458
        %v2469 = vunpack.c.h.b16 %v2459
        %v2470 = vunpack.c.l.b16 %v2460
        %v2471 = vunpack.c.l.b16 %v2461
        %v2472 = vunpack.c.h.b16 %v2460
        %v2473 = vunpack.c.h.b16 %v2461
        %v2474 = vpack.c.b16 %v2467, %v2466
        %v2475 = vpack.c.b16 %v2469, %v2468
        %v2476 = vpack.c.b16 %v2471, %v2470
        %v2477 = vpack.c.b16 %v2473, %v2472
        %2482 = vst [vmem:[%s524] sm:$0xff] %v2474
        %2483 = vst [vmem:[%s524 + $0x8] sm:$0xff] %v2475
        %2484 = vst [vmem:[%s524 + $0x10] sm:$0xff] %v2476
        %2485 = vst [vmem:[%s524 + $0x18] sm:$0xff] %v2477
        %s2486 = sand.u32 %s313, 1
        %s2487 = scalar_lea.sflag [#allocation5], %s2486
        %s2488 = sand.u32 %s313, 1
        %s2489 = smul.addr %s2488, 32
        %s2490 = scalar_lea.vmem [#allocation9], %s2489
        // Predicated region
        $region81: #{tpu_custom_call.1} parent=67 // pred_check
          %p2491 = pneg %p323
        $region82: #{tpu_custom_call.1} parent=67 // pred_check_branch
          %2493 = sbr.rel (%p2491) target = $region84
        $region83: #{tpu_custom_call.1} parent=67 // pred_region
          %s2495 = ssub.s32 512, 512
          %2496 = vsyncadd %s2487, %s2495
          %s2497 = smul.addr %s33, 8
          %s2498 = smul.addr %s2497, 64
          %s2499 = scalar_lea.hbm %s12, %s2498
          %s2500 = sshll.u32 %s2490, 4
          %s2501 = int_to_ptr.vmem [resolvable:$true] %s2500
          %2506 = dma.vmem_to_hbm [thread:$0]  %s2501, 512, %s2499, %s2487, 128, 128, 8
        $region84: #{tpu_custom_call.1} parent=67 // pred_fallthru
          _
      $region68: #{tpu_custom_call.1} parent=5 // pred_fallthru
        _
      %p2507 = scmp.le.s32.totalorder 2, %s28
      // Predicated region
      $region85: #{tpu_custom_call.1} parent=5 // pred_check
        %p2508 = pneg %p2507
      $region86: #{tpu_custom_call.1} parent=5 // pred_check_branch
        %2510 = sbr.rel (%p2508) target = $region88
      $region87: #{tpu_custom_call.1} parent=5 // pred_region
        %s2511 = ssub.s32 %s28, 2
        // Predicated region
        $region89: #{tpu_custom_call.1} parent=87 // pred_check
          %p2512 = pneg %p329
        $region90: #{tpu_custom_call.1} parent=87 // pred_check_branch
          %2514 = sbr.rel (%p2512) target = $region92
        $region91: #{tpu_custom_call.1} parent=87 // pred_region
          %s2515 = sand.u32 %s314, 1
          %s2516 = scalar_lea.sflag [#allocation5], %s2515
          %s2517 = sand.u32 %s314, 1
          %s2518 = smul.addr %s2517, 32
          %s2519 = scalar_lea.vmem [#allocation9], %s2518
          %2520 = dma.done %s2516, 512
        $region92: #{tpu_custom_call.1} parent=87 // pred_fallthru
          _
      $region88: #{tpu_custom_call.1} parent=5 // pred_fallthru
        _
    $region6: #{tpu_custom_call.1} parent=1 // loop_footer
      %s32 = sadd.s32 1, %s28
    $region7: #{tpu_custom_call.1} parent=1 // loop_footer_branch
      %27 = sbr.rel target = $region3
    $region8: #{tpu_custom_call.1} parent=1 // loop_exit
      _
    %2521 = vsyncpa [#allocation4], 1
    %s2522 = scalar_lea.sflag [#allocation4], 1
    %2523 = vsyncpa %s2522, 1
    %2524 = vsyncpa [#allocation7], 1
    %s2525 = scalar_lea.sflag [#allocation7], 1
    %2526 = vsyncpa %s2525, 1
    %2527 = vsyncpa [#allocation5], 1
    %s2528 = scalar_lea.sflag [#allocation5], 1
    %2529 = vsyncpa %s2528, 1

</llo_original>
